<compile_context>
chip_gen: v5e
topology: v5e:2x2
jax: 0.10.0
libtpu: 0.0.40
codegen_flags: <defaults>
</compile_context>

<pallas_src>
import jax
import jax.numpy as jnp
from jax.experimental import pallas as pl
from jax.experimental.pallas import tpu as pltpu


# --------------------------- fused forward kernel (no grid, all VMEM) ---------------------------
def _fused_forward_kernel(x2d_ref, wbig_ref, bbig_ref, wih0big_ref, bg0_ref,
                          wih_ref, whh_ref, bl_ref, wcls_ref, bcls_ref, out_ref):
    B = x2d_ref.shape[0]
    num_layers, H, H4 = whh_ref.shape          # whh_ref: (num_layers, H, 4H)
    L = wbig_ref.shape[1] // H

    # Conv1d(k=1) + sigmoid with both torch .view() rearrangements folded into Wbig:
    # zflat[b, t*H + c] == z[b, t, c], the LSTM input after the second torch view.
    zflat = jax.nn.sigmoid(
        jnp.dot(x2d_ref[...], wbig_ref[...], preferred_element_type=jnp.float32)
        + bbig_ref[...])                                             # (B, L*H)

    # Layer-0 input projections for ALL timesteps as one block-diagonal matmul:
    # gx0flat[:, t*4H:(t+1)*4H] == z[:, t, :] @ W_ih0^T + (b_ih0 + b_hh0).
    gx0flat = (jnp.dot(zflat, wih0big_ref[...], preferred_element_type=jnp.float32)
               + bg0_ref[...])                                       # (B, L*4H)

    # Wavefront over (layer, timestep): at global step s, layer l handles t = s - l.
    # Within a global step every layer's matmuls are mutually independent (each consumes
    # hidden states produced at step s-1), so they pipeline through the MXU.
    h = [jnp.zeros((B, H), jnp.float32) for _ in range(num_layers)]
    c = [jnp.zeros((B, H), jnp.float32) for _ in range(num_layers)]
    h_below = [None] * num_layers              # h_{l-1}(t), produced one global step earlier
    last_h = None
    for s in range(L + num_layers - 1):        # fully unrolled, L and num_layers are static
        new_below = list(h_below)
        for l in range(num_layers):
            t = s - l
            if t < 0 or t >= L:
                continue
            if l == 0:
                gx = gx0flat[:, t * H4:(t + 1) * H4]                 # aligned 128-lane slice
            else:
                gx = (jnp.dot(h_below[l], wih_ref[l], preferred_element_type=jnp.float32)
                      + bl_ref[l])
            gates = gx + jnp.dot(h[l], whh_ref[l], preferred_element_type=jnp.float32)  # (B, 4H)
            # Two EUP pushes on the full 128-lane block, then cheap lane extractions.
            sg = jax.nn.sigmoid(gates)
            th = jnp.tanh(gates)
            i_g = sg[:, 0 * H:1 * H]           # PyTorch gate order: i, f, g, o
            f_g = sg[:, 1 * H:2 * H]
            g_g = th[:, 2 * H:3 * H]
            o_g = sg[:, 3 * H:4 * H]
            c[l] = f_g * c[l] + i_g * g_g
            h[l] = o_g * jnp.tanh(c[l])
            if l + 1 < num_layers:
                new_below[l + 1] = h[l]        # feeds layer l+1 at global step s+1
            if l == num_layers - 1 and t == L - 1:
                last_h = h[l]
        h_below = new_below

    # Classifier only on the last timestep of the last layer (torch keeps pred[:, -1, :]).
    out_ref[...] = (jnp.dot(last_h, wcls_ref[...], preferred_element_type=jnp.float32)
                    + bcls_ref[...]).astype(out_ref.dtype)


# ------------------------------ one-time weight preprocessing ------------------------------
def prepare_params(params, seq_len):
    """Fold torch-view scrambles + layer-0 input projection into weights; pre-transpose once."""
    conv_w = params["conv_w"]                  # (H, I)  Conv1d(k=1) weight, kernel dim squeezed
    conv_b = params["conv_b"]                  # (H,)
    H, I = conv_w.shape
    L = seq_len

    # Review correctness concern: the kernel layout assumes conv out-channels == LSTM input
    # size == hidden size for every layer.  Fail loudly instead of silently mis-slicing.
    for lw in params["lstm"]:
        assert lw["w_ih"].shape == (4 * H, H) and lw["w_hh"].shape == (4 * H, H), \
            "kernel assumes LSTM input size == conv out-channels == hidden size"

    # Wbig[i*L + l, h*L + l] = conv_w[h, i]; zero elsewhere.  x_flat @ Wbig reproduces
    # conv1d applied to x.view(B, I, L); the subsequent .view(B, L, H) is a flat-memory
    # identity, so zflat = sigmoid(x_flat @ Wbig + bbig) is exactly the LSTM input sequence.
    eye = jnp.eye(L, dtype=conv_w.dtype)
    wbig = jnp.einsum("hi,lm->ilhm", conv_w, eye).reshape(I * L, H * L)   # (I*L, H*L)
    bbig = jnp.repeat(conv_b, L).reshape(1, H * L)                        # bbig[h*L+l] = b[h]

    wihT = jnp.stack([jnp.transpose(lw["w_ih"]) for lw in params["lstm"]])              # (nl, H, 4H)
    whhT = jnp.stack([jnp.transpose(lw["w_hh"]) for lw in params["lstm"]])              # (nl, H, 4H)
    bl = jnp.stack([(lw["b_ih"] + lw["b_hh"]).reshape(1, -1) for lw in params["lstm"]]) # (nl, 1, 4H)

    # Layer-0 input projection folded over all timesteps: block-diagonal kron(I_L, W_ih0^T),
    # shape (L*H, L*4H); bias tiled L times so gx0flat[:, t*4H+g] gets bias0[g].
    wih0big = jnp.kron(eye, wihT[0])                                      # (L*H, L*4H)
    bg0 = jnp.tile(bl[0], (1, L))                                         # (1, L*4H)

    return {
        "wbig": wbig, "bbig": bbig,
        "wih0big": wih0big, "bg0": bg0,
        "wihT": wihT, "whhT": whhT, "bl": bl,
        "wclsT": jnp.transpose(params["cls_w"]),        # (H, O)
        "bcls": params["cls_b"].reshape(1, -1),         # (1, O)
    }


# ------------------------------------ full forward pass ------------------------------------
def cnn_lstm_forward(x, prep, *, batch_size, input_size):
    B = batch_size
    L = x.shape[1]                                        # torch: seq_len = x.shape[1]
    O = prep["wclsT"].shape[1]
    x2d = jnp.reshape(x, (B, L * input_size))             # free flat reshape (covers the torch view)

    # Everything (~1.3 MB) is whole-array resident in VMEM; no tiling needed on any generation.
    vmem = pl.BlockSpec(memory_space=pltpu.MemorySpace.VMEM)
    return pl.pallas_call(
        _fused_forward_kernel,
        out_shape=jax.ShapeDtypeStruct((B, O), x.dtype),
        in_specs=[vmem] * 10,
        out_specs=vmem,
    )(x2d, prep["wbig"], prep["bbig"], prep["wih0big"], prep["bg0"],
      prep["wihT"], prep["whhT"], prep["bl"], prep["wclsT"], prep["bcls"])


# ------------------------------- pure-JAX reference (sanity) -------------------------------
def reference_forward(x, params, *, batch_size, input_size):
    B = batch_size
    L = x.shape[1]
    H = params["conv_w"].shape[0]
    xv = jnp.reshape(x, (B, input_size, L))                               # torch view 1
    y = jax.nn.sigmoid(jnp.einsum("hi,bil->bhl", params["conv_w"], xv)
                       + params["conv_b"][None, :, None])                 # conv1x1 + sigmoid
    h_seq = jnp.reshape(y, (B, L, H))                                     # torch view 2
    for lw in params["lstm"]:
        hh = jnp.zeros((B, H), jnp.float32)
        cc = jnp.zeros((B, H), jnp.float32)
        outs = []
        for t in range(L):
            gates = (h_seq[:, t, :] @ lw["w_ih"].T + hh @ lw["w_hh"].T
                     + lw["b_ih"] + lw["b_hh"])
            ig = jax.nn.sigmoid(gates[:, :H])
            fg = jax.nn.sigmoid(gates[:, H:2 * H])
            gg = jnp.tanh(gates[:, 2 * H:3 * H])
            og = jax.nn.sigmoid(gates[:, 3 * H:4 * H])
            cc = fg * cc + ig * gg
            hh = og * jnp.tanh(cc)
            outs.append(hh)
        h_seq = jnp.stack(outs, axis=1)
    return h_seq[:, -1, :] @ params["cls_w"].T + params["cls_b"]          # only last timestep matters


# ------------------------------------ parameter init ------------------------------------
def init_params(key, input_size, hidden_size, num_layers, output_size):
    def u(k, shape, scale=0.1):
        return jax.random.uniform(k, shape, jnp.float32, -scale, scale)

    keys = jax.random.split(key, 4 + 4 * num_layers)
    params = {
        "conv_w": u(keys[0], (hidden_size, input_size)),   # Conv1d weight (k=1) squeezed
        "conv_b": u(keys[1], (hidden_size,)),
        "cls_w": u(keys[2], (output_size, hidden_size)),
        "cls_b": u(keys[3], (output_size,)),
        "lstm": [],
    }
    for l in range(num_layers):
        k0, k1, k2, k3 = keys[4 + 4 * l: 8 + 4 * l]
        params["lstm"].append({
            "w_ih": u(k0, (4 * hidden_size, hidden_size)),
            "w_hh": u(k1, (4 * hidden_size, hidden_size)),
            "b_ih": u(k2, (4 * hidden_size,)),
            "b_hh": u(k3, (4 * hidden_size,)),
        })
    return params


if __name__ == "__main__":
    input_size, hidden_size, num_layers, output_size = 4, 32, 2, 4
    batch_size, seq_len, window = 2, 8, 1

    key = jax.random.PRNGKey(0)
    pkey, xkey = jax.random.split(key)
    params = init_params(pkey, input_size, hidden_size, num_layers, output_size)
    x = jax.random.normal(xkey, (batch_size, seq_len, input_size), jnp.float32)

    prep = prepare_params(params, seq_len)                 # one-time weight preprocessing

    @jax.jit
    def fwd(x_, prep_):
        return cnn_lstm_forward(x_, prep_, batch_size=batch_size, input_size=input_size)

    pred = jax.block_until_ready(fwd(x, prep))

    # Reference at highest matmul precision; 5e-3 tolerance covers possible reduced-precision
    # MXU passes for f32 matmuls across generations while still catching any gate-order /
    # weight-layout bug (those produce O(0.1) errors).
    with jax.default_matmul_precision("highest"):
        ref = jax.block_until_ready(
            reference_forward(x, params, batch_size=batch_size, input_size=input_size))

    assert pred.shape == (batch_size, output_size)
    max_diff = float(jnp.max(jnp.abs(pred - ref)))
    assert jnp.allclose(pred, ref, rtol=5e-3, atol=5e-3), \
        f"mismatch vs pure-JAX reference, max|diff|={max_diff}"

    print("KERNEL_OK")
</pallas_src>

<mosaic_0001>
module attributes {stable_mosaic.version = 11 : i64} {
  func.func @_fused_forward_kernel(%arg0: memref<2x32xf32, #tpu.memory_space<vmem>>, %arg1: memref<32x256xf32, #tpu.memory_space<vmem>>, %arg2: memref<1x256xf32, #tpu.memory_space<vmem>>, %arg3: memref<256x1024xf32, #tpu.memory_space<vmem>>, %arg4: memref<1x1024xf32, #tpu.memory_space<vmem>>, %arg5: memref<2x32x128xf32, #tpu.memory_space<vmem>>, %arg6: memref<2x32x128xf32, #tpu.memory_space<vmem>>, %arg7: memref<2x1x128xf32, #tpu.memory_space<vmem>>, %arg8: memref<32x4xf32, #tpu.memory_space<vmem>>, %arg9: memref<1x4xf32, #tpu.memory_space<vmem>>, %arg10: memref<2x4xf32, #tpu.memory_space<vmem>>) attributes {dimension_semantics = [], scalar_prefetch = 0 : i64, scratch_operands = 0 : i64, tpu.core_type = #tpu.core_type<tc>} {
    %c0 = arith.constant 0 : index
    %c0_0 = arith.constant 0 : index
    %0 = vector.load %arg0[%c0, %c0_0] : memref<2x32xf32, #tpu.memory_space<vmem>>, vector<2x32xf32>
    %c0_1 = arith.constant 0 : index
    %c0_2 = arith.constant 0 : index
    %1 = vector.load %arg1[%c0_1, %c0_2] : memref<32x256xf32, #tpu.memory_space<vmem>>, vector<32x256xf32>
    %cst = arith.constant dense<0.000000e+00> : vector<2x256xf32>
    %2 = tpu.matmul %0, %1, %cst {dimension_numbers = #tpu.dot_dimension_numbers<[1], [0], [0], [1], [0, 0, 1, 1], [], []>} : vector<2x32xf32>, vector<32x256xf32>, vector<2x256xf32> -> vector<2x256xf32>
    %c0_3 = arith.constant 0 : index
    %c0_4 = arith.constant 0 : index
    %3 = vector.load %arg2[%c0_3, %c0_4] : memref<1x256xf32, #tpu.memory_space<vmem>>, vector<1x256xf32>
    %4 = vector.broadcast %3 : vector<1x256xf32> to vector<2x256xf32>
    %5 = arith.addf %2, %4 : vector<2x256xf32>
    %6 = arith.negf %5 : vector<2x256xf32>
    %7 = math.exp %6 : vector<2x256xf32>
    %cst_5 = arith.constant 1.000000e+00 : f32
    %8 = vector.broadcast %cst_5 : f32 to vector<2x256xf32>
    %9 = arith.addf %8, %7 : vector<2x256xf32>
    %10 = arith.divf %8, %9 : vector<2x256xf32>
    %c0_6 = arith.constant 0 : index
    %c0_7 = arith.constant 0 : index
    %11 = vector.load %arg3[%c0_6, %c0_7] : memref<256x1024xf32, #tpu.memory_space<vmem>>, vector<256x1024xf32>
    %cst_8 = arith.constant dense<0.000000e+00> : vector<2x1024xf32>
    %12 = tpu.matmul %10, %11, %cst_8 {dimension_numbers = #tpu.dot_dimension_numbers<[1], [0], [0], [1], [0, 0, 1, 1], [], []>} : vector<2x256xf32>, vector<256x1024xf32>, vector<2x1024xf32> -> vector<2x1024xf32>
    %c0_9 = arith.constant 0 : index
    %c0_10 = arith.constant 0 : index
    %13 = vector.load %arg4[%c0_9, %c0_10] : memref<1x1024xf32, #tpu.memory_space<vmem>>, vector<1x1024xf32>
    %14 = vector.broadcast %13 : vector<1x1024xf32> to vector<2x1024xf32>
    %15 = arith.addf %12, %14 : vector<2x1024xf32>
    %cst_11 = arith.constant 0.000000e+00 : f32
    %16 = vector.broadcast %cst_11 : f32 to vector<2x32xf32>
    %cst_12 = arith.constant 0.000000e+00 : f32
    %17 = vector.broadcast %cst_12 : f32 to vector<2x32xf32>
    %cst_13 = arith.constant 0.000000e+00 : f32
    %18 = vector.broadcast %cst_13 : f32 to vector<2x32xf32>
    %cst_14 = arith.constant 0.000000e+00 : f32
    %19 = vector.broadcast %cst_14 : f32 to vector<2x32xf32>
    %20 = vector.extract_strided_slice %15 {offsets = [0, 0], sizes = [2, 128], strides = [1, 1]} : vector<2x1024xf32> to vector<2x128xf32>
    %c0_15 = arith.constant 0 : index
    %c0_16 = arith.constant 0 : index
    %c0_17 = arith.constant 0 : index
    %21 = vector.load %arg6[%c0_15, %c0_16, %c0_17] : memref<2x32x128xf32, #tpu.memory_space<vmem>>, vector<1x32x128xf32>
    %22 = vector.shape_cast %21 : vector<1x32x128xf32> to vector<32x128xf32>
    %cst_18 = arith.constant dense<0.000000e+00> : vector<2x128xf32>
    %23 = tpu.matmul %16, %22, %cst_18 {dimension_numbers = #tpu.dot_dimension_numbers<[1], [0], [0], [1], [0, 0, 1, 1], [], []>} : vector<2x32xf32>, vector<32x128xf32>, vector<2x128xf32> -> vector<2x128xf32>
    %24 = arith.addf %20, %23 : vector<2x128xf32>
    %25 = arith.negf %24 : vector<2x128xf32>
    %26 = math.exp %25 : vector<2x128xf32>
    %cst_19 = arith.constant 1.000000e+00 : f32
    %27 = vector.broadcast %cst_19 : f32 to vector<2x128xf32>
    %28 = arith.addf %27, %26 : vector<2x128xf32>
    %29 = arith.divf %27, %28 : vector<2x128xf32>
    %30 = math.tanh %24 : vector<2x128xf32>
    %31 = vector.extract_strided_slice %29 {offsets = [0, 0], sizes = [2, 32], strides = [1, 1]} : vector<2x128xf32> to vector<2x32xf32>
    %32 = vector.extract_strided_slice %29 {offsets = [0, 32], sizes = [2, 32], strides = [1, 1]} : vector<2x128xf32> to vector<2x32xf32>
    %33 = vector.extract_strided_slice %30 {offsets = [0, 64], sizes = [2, 32], strides = [1, 1]} : vector<2x128xf32> to vector<2x32xf32>
    %34 = vector.extract_strided_slice %29 {offsets = [0, 96], sizes = [2, 32], strides = [1, 1]} : vector<2x128xf32> to vector<2x32xf32>
    %35 = arith.mulf %32, %18 : vector<2x32xf32>
    %36 = arith.mulf %31, %33 : vector<2x32xf32>
    %37 = arith.addf %35, %36 : vector<2x32xf32>
    %38 = math.tanh %37 : vector<2x32xf32>
    %39 = arith.mulf %34, %38 : vector<2x32xf32>
    %40 = vector.extract_strided_slice %15 {offsets = [0, 128], sizes = [2, 128], strides = [1, 1]} : vector<2x1024xf32> to vector<2x128xf32>
    %c0_20 = arith.constant 0 : index
    %c0_21 = arith.constant 0 : index
    %c0_22 = arith.constant 0 : index
    %41 = vector.load %arg6[%c0_20, %c0_21, %c0_22] : memref<2x32x128xf32, #tpu.memory_space<vmem>>, vector<1x32x128xf32>
    %42 = vector.shape_cast %41 : vector<1x32x128xf32> to vector<32x128xf32>
    %cst_23 = arith.constant dense<0.000000e+00> : vector<2x128xf32>
    %43 = tpu.matmul %39, %42, %cst_23 {dimension_numbers = #tpu.dot_dimension_numbers<[1], [0], [0], [1], [0, 0, 1, 1], [], []>} : vector<2x32xf32>, vector<32x128xf32>, vector<2x128xf32> -> vector<2x128xf32>
    %44 = arith.addf %40, %43 : vector<2x128xf32>
    %45 = arith.negf %44 : vector<2x128xf32>
    %46 = math.exp %45 : vector<2x128xf32>
    %cst_24 = arith.constant 1.000000e+00 : f32
    %47 = vector.broadcast %cst_24 : f32 to vector<2x128xf32>
    %48 = arith.addf %47, %46 : vector<2x128xf32>
    %49 = arith.divf %47, %48 : vector<2x128xf32>
    %50 = math.tanh %44 : vector<2x128xf32>
    %51 = vector.extract_strided_slice %49 {offsets = [0, 0], sizes = [2, 32], strides = [1, 1]} : vector<2x128xf32> to vector<2x32xf32>
    %52 = vector.extract_strided_slice %49 {offsets = [0, 32], sizes = [2, 32], strides = [1, 1]} : vector<2x128xf32> to vector<2x32xf32>
    %53 = vector.extract_strided_slice %50 {offsets = [0, 64], sizes = [2, 32], strides = [1, 1]} : vector<2x128xf32> to vector<2x32xf32>
    %54 = vector.extract_strided_slice %49 {offsets = [0, 96], sizes = [2, 32], strides = [1, 1]} : vector<2x128xf32> to vector<2x32xf32>
    %55 = arith.mulf %52, %37 : vector<2x32xf32>
    %56 = arith.mulf %51, %53 : vector<2x32xf32>
    %57 = arith.addf %55, %56 : vector<2x32xf32>
    %58 = math.tanh %57 : vector<2x32xf32>
    %59 = arith.mulf %54, %58 : vector<2x32xf32>
    %c1 = arith.constant 1 : index
    %c0_25 = arith.constant 0 : index
    %c0_26 = arith.constant 0 : index
    %60 = vector.load %arg5[%c1, %c0_25, %c0_26] : memref<2x32x128xf32, #tpu.memory_space<vmem>>, vector<1x32x128xf32>
    %61 = vector.shape_cast %60 : vector<1x32x128xf32> to vector<32x128xf32>
    %cst_27 = arith.constant dense<0.000000e+00> : vector<2x128xf32>
    %62 = tpu.matmul %39, %61, %cst_27 {dimension_numbers = #tpu.dot_dimension_numbers<[1], [0], [0], [1], [0, 0, 1, 1], [], []>} : vector<2x32xf32>, vector<32x128xf32>, vector<2x128xf32> -> vector<2x128xf32>
    %c1_28 = arith.constant 1 : index
    %c0_29 = arith.constant 0 : index
    %c0_30 = arith.constant 0 : index
    %63 = vector.load %arg7[%c1_28, %c0_29, %c0_30] : memref<2x1x128xf32, #tpu.memory_space<vmem>>, vector<1x1x128xf32>
    %64 = vector.shape_cast %63 : vector<1x1x128xf32> to vector<1x128xf32>
    %65 = vector.broadcast %64 : vector<1x128xf32> to vector<2x128xf32>
    %66 = arith.addf %62, %65 : vector<2x128xf32>
    %c1_31 = arith.constant 1 : index
    %c0_32 = arith.constant 0 : index
    %c0_33 = arith.constant 0 : index
    %67 = vector.load %arg6[%c1_31, %c0_32, %c0_33] : memref<2x32x128xf32, #tpu.memory_space<vmem>>, vector<1x32x128xf32>
    %68 = vector.shape_cast %67 : vector<1x32x128xf32> to vector<32x128xf32>
    %cst_34 = arith.constant dense<0.000000e+00> : vector<2x128xf32>
    %69 = tpu.matmul %17, %68, %cst_34 {dimension_numbers = #tpu.dot_dimension_numbers<[1], [0], [0], [1], [0, 0, 1, 1], [], []>} : vector<2x32xf32>, vector<32x128xf32>, vector<2x128xf32> -> vector<2x128xf32>
    %70 = arith.addf %66, %69 : vector<2x128xf32>
    %71 = arith.negf %70 : vector<2x128xf32>
    %72 = math.exp %71 : vector<2x128xf32>
    %cst_35 = arith.constant 1.000000e+00 : f32
    %73 = vector.broadcast %cst_35 : f32 to vector<2x128xf32>
    %74 = arith.addf %73, %72 : vector<2x128xf32>
    %75 = arith.divf %73, %74 : vector<2x128xf32>
    %76 = math.tanh %70 : vector<2x128xf32>
    %77 = vector.extract_strided_slice %75 {offsets = [0, 0], sizes = [2, 32], strides = [1, 1]} : vector<2x128xf32> to vector<2x32xf32>
    %78 = vector.extract_strided_slice %75 {offsets = [0, 32], sizes = [2, 32], strides = [1, 1]} : vector<2x128xf32> to vector<2x32xf32>
    %79 = vector.extract_strided_slice %76 {offsets = [0, 64], sizes = [2, 32], strides = [1, 1]} : vector<2x128xf32> to vector<2x32xf32>
    %80 = vector.extract_strided_slice %75 {offsets = [0, 96], sizes = [2, 32], strides = [1, 1]} : vector<2x128xf32> to vector<2x32xf32>
    %81 = arith.mulf %78, %19 : vector<2x32xf32>
    %82 = arith.mulf %77, %79 : vector<2x32xf32>
    %83 = arith.addf %81, %82 : vector<2x32xf32>
    %84 = math.tanh %83 : vector<2x32xf32>
    %85 = arith.mulf %80, %84 : vector<2x32xf32>
    %86 = vector.extract_strided_slice %15 {offsets = [0, 256], sizes = [2, 128], strides = [1, 1]} : vector<2x1024xf32> to vector<2x128xf32>
    %c0_36 = arith.constant 0 : index
    %c0_37 = arith.constant 0 : index
    %c0_38 = arith.constant 0 : index
    %87 = vector.load %arg6[%c0_36, %c0_37, %c0_38] : memref<2x32x128xf32, #tpu.memory_space<vmem>>, vector<1x32x128xf32>
    %88 = vector.shape_cast %87 : vector<1x32x128xf32> to vector<32x128xf32>
    %cst_39 = arith.constant dense<0.000000e+00> : vector<2x128xf32>
    %89 = tpu.matmul %59, %88, %cst_39 {dimension_numbers = #tpu.dot_dimension_numbers<[1], [0], [0], [1], [0, 0, 1, 1], [], []>} : vector<2x32xf32>, vector<32x128xf32>, vector<2x128xf32> -> vector<2x128xf32>
    %90 = arith.addf %86, %89 : vector<2x128xf32>
    %91 = arith.negf %90 : vector<2x128xf32>
    %92 = math.exp %91 : vector<2x128xf32>
    %cst_40 = arith.constant 1.000000e+00 : f32
    %93 = vector.broadcast %cst_40 : f32 to vector<2x128xf32>
    %94 = arith.addf %93, %92 : vector<2x128xf32>
    %95 = arith.divf %93, %94 : vector<2x128xf32>
    %96 = math.tanh %90 : vector<2x128xf32>
    %97 = vector.extract_strided_slice %95 {offsets = [0, 0], sizes = [2, 32], strides = [1, 1]} : vector<2x128xf32> to vector<2x32xf32>
    %98 = vector.extract_strided_slice %95 {offsets = [0, 32], sizes = [2, 32], strides = [1, 1]} : vector<2x128xf32> to vector<2x32xf32>
    %99 = vector.extract_strided_slice %96 {offsets = [0, 64], sizes = [2, 32], strides = [1, 1]} : vector<2x128xf32> to vector<2x32xf32>
    %100 = vector.extract_strided_slice %95 {offsets = [0, 96], sizes = [2, 32], strides = [1, 1]} : vector<2x128xf32> to vector<2x32xf32>
    %101 = arith.mulf %98, %57 : vector<2x32xf32>
    %102 = arith.mulf %97, %99 : vector<2x32xf32>
    %103 = arith.addf %101, %102 : vector<2x32xf32>
    %104 = math.tanh %103 : vector<2x32xf32>
    %105 = arith.mulf %100, %104 : vector<2x32xf32>
    %c1_41 = arith.constant 1 : index
    %c0_42 = arith.constant 0 : index
    %c0_43 = arith.constant 0 : index
    %106 = vector.load %arg5[%c1_41, %c0_42, %c0_43] : memref<2x32x128xf32, #tpu.memory_space<vmem>>, vector<1x32x128xf32>
    %107 = vector.shape_cast %106 : vector<1x32x128xf32> to vector<32x128xf32>
    %cst_44 = arith.constant dense<0.000000e+00> : vector<2x128xf32>
    %108 = tpu.matmul %59, %107, %cst_44 {dimension_numbers = #tpu.dot_dimension_numbers<[1], [0], [0], [1], [0, 0, 1, 1], [], []>} : vector<2x32xf32>, vector<32x128xf32>, vector<2x128xf32> -> vector<2x128xf32>
    %c1_45 = arith.constant 1 : index
    %c0_46 = arith.constant 0 : index
    %c0_47 = arith.constant 0 : index
    %109 = vector.load %arg7[%c1_45, %c0_46, %c0_47] : memref<2x1x128xf32, #tpu.memory_space<vmem>>, vector<1x1x128xf32>
    %110 = vector.shape_cast %109 : vector<1x1x128xf32> to vector<1x128xf32>
    %111 = vector.broadcast %110 : vector<1x128xf32> to vector<2x128xf32>
    %112 = arith.addf %108, %111 : vector<2x128xf32>
    %c1_48 = arith.constant 1 : index
    %c0_49 = arith.constant 0 : index
    %c0_50 = arith.constant 0 : index
    %113 = vector.load %arg6[%c1_48, %c0_49, %c0_50] : memref<2x32x128xf32, #tpu.memory_space<vmem>>, vector<1x32x128xf32>
    %114 = vector.shape_cast %113 : vector<1x32x128xf32> to vector<32x128xf32>
    %cst_51 = arith.constant dense<0.000000e+00> : vector<2x128xf32>
    %115 = tpu.matmul %85, %114, %cst_51 {dimension_numbers = #tpu.dot_dimension_numbers<[1], [0], [0], [1], [0, 0, 1, 1], [], []>} : vector<2x32xf32>, vector<32x128xf32>, vector<2x128xf32> -> vector<2x128xf32>
    %116 = arith.addf %112, %115 : vector<2x128xf32>
    %117 = arith.negf %116 : vector<2x128xf32>
    %118 = math.exp %117 : vector<2x128xf32>
    %cst_52 = arith.constant 1.000000e+00 : f32
    %119 = vector.broadcast %cst_52 : f32 to vector<2x128xf32>
    %120 = arith.addf %119, %118 : vector<2x128xf32>
    %121 = arith.divf %119, %120 : vector<2x128xf32>
    %122 = math.tanh %116 : vector<2x128xf32>
    %123 = vector.extract_strided_slice %121 {offsets = [0, 0], sizes = [2, 32], strides = [1, 1]} : vector<2x128xf32> to vector<2x32xf32>
    %124 = vector.extract_strided_slice %121 {offsets = [0, 32], sizes = [2, 32], strides = [1, 1]} : vector<2x128xf32> to vector<2x32xf32>
    %125 = vector.extract_strided_slice %122 {offsets = [0, 64], sizes = [2, 32], strides = [1, 1]} : vector<2x128xf32> to vector<2x32xf32>
    %126 = vector.extract_strided_slice %121 {offsets = [0, 96], sizes = [2, 32], strides = [1, 1]} : vector<2x128xf32> to vector<2x32xf32>
    %127 = arith.mulf %124, %83 : vector<2x32xf32>
    %128 = arith.mulf %123, %125 : vector<2x32xf32>
    %129 = arith.addf %127, %128 : vector<2x32xf32>
    %130 = math.tanh %129 : vector<2x32xf32>
    %131 = arith.mulf %126, %130 : vector<2x32xf32>
    %132 = vector.extract_strided_slice %15 {offsets = [0, 384], sizes = [2, 128], strides = [1, 1]} : vector<2x1024xf32> to vector<2x128xf32>
    %c0_53 = arith.constant 0 : index
    %c0_54 = arith.constant 0 : index
    %c0_55 = arith.constant 0 : index
    %133 = vector.load %arg6[%c0_53, %c0_54, %c0_55] : memref<2x32x128xf32, #tpu.memory_space<vmem>>, vector<1x32x128xf32>
    %134 = vector.shape_cast %133 : vector<1x32x128xf32> to vector<32x128xf32>
    %cst_56 = arith.constant dense<0.000000e+00> : vector<2x128xf32>
    %135 = tpu.matmul %105, %134, %cst_56 {dimension_numbers = #tpu.dot_dimension_numbers<[1], [0], [0], [1], [0, 0, 1, 1], [], []>} : vector<2x32xf32>, vector<32x128xf32>, vector<2x128xf32> -> vector<2x128xf32>
    %136 = arith.addf %132, %135 : vector<2x128xf32>
    %137 = arith.negf %136 : vector<2x128xf32>
    %138 = math.exp %137 : vector<2x128xf32>
    %cst_57 = arith.constant 1.000000e+00 : f32
    %139 = vector.broadcast %cst_57 : f32 to vector<2x128xf32>
    %140 = arith.addf %139, %138 : vector<2x128xf32>
    %141 = arith.divf %139, %140 : vector<2x128xf32>
    %142 = math.tanh %136 : vector<2x128xf32>
    %143 = vector.extract_strided_slice %141 {offsets = [0, 0], sizes = [2, 32], strides = [1, 1]} : vector<2x128xf32> to vector<2x32xf32>
    %144 = vector.extract_strided_slice %141 {offsets = [0, 32], sizes = [2, 32], strides = [1, 1]} : vector<2x128xf32> to vector<2x32xf32>
    %145 = vector.extract_strided_slice %142 {offsets = [0, 64], sizes = [2, 32], strides = [1, 1]} : vector<2x128xf32> to vector<2x32xf32>
    %146 = vector.extract_strided_slice %141 {offsets = [0, 96], sizes = [2, 32], strides = [1, 1]} : vector<2x128xf32> to vector<2x32xf32>
    %147 = arith.mulf %144, %103 : vector<2x32xf32>
    %148 = arith.mulf %143, %145 : vector<2x32xf32>
    %149 = arith.addf %147, %148 : vector<2x32xf32>
    %150 = math.tanh %149 : vector<2x32xf32>
    %151 = arith.mulf %146, %150 : vector<2x32xf32>
    %c1_58 = arith.constant 1 : index
    %c0_59 = arith.constant 0 : index
    %c0_60 = arith.constant 0 : index
    %152 = vector.load %arg5[%c1_58, %c0_59, %c0_60] : memref<2x32x128xf32, #tpu.memory_space<vmem>>, vector<1x32x128xf32>
    %153 = vector.shape_cast %152 : vector<1x32x128xf32> to vector<32x128xf32>
    %cst_61 = arith.constant dense<0.000000e+00> : vector<2x128xf32>
    %154 = tpu.matmul %105, %153, %cst_61 {dimension_numbers = #tpu.dot_dimension_numbers<[1], [0], [0], [1], [0, 0, 1, 1], [], []>} : vector<2x32xf32>, vector<32x128xf32>, vector<2x128xf32> -> vector<2x128xf32>
    %c1_62 = arith.constant 1 : index
    %c0_63 = arith.constant 0 : index
    %c0_64 = arith.constant 0 : index
    %155 = vector.load %arg7[%c1_62, %c0_63, %c0_64] : memref<2x1x128xf32, #tpu.memory_space<vmem>>, vector<1x1x128xf32>
    %156 = vector.shape_cast %155 : vector<1x1x128xf32> to vector<1x128xf32>
    %157 = vector.broadcast %156 : vector<1x128xf32> to vector<2x128xf32>
    %158 = arith.addf %154, %157 : vector<2x128xf32>
    %c1_65 = arith.constant 1 : index
    %c0_66 = arith.constant 0 : index
    %c0_67 = arith.constant 0 : index
    %159 = vector.load %arg6[%c1_65, %c0_66, %c0_67] : memref<2x32x128xf32, #tpu.memory_space<vmem>>, vector<1x32x128xf32>
    %160 = vector.shape_cast %159 : vector<1x32x128xf32> to vector<32x128xf32>
    %cst_68 = arith.constant dense<0.000000e+00> : vector<2x128xf32>
    %161 = tpu.matmul %131, %160, %cst_68 {dimension_numbers = #tpu.dot_dimension_numbers<[1], [0], [0], [1], [0, 0, 1, 1], [], []>} : vector<2x32xf32>, vector<32x128xf32>, vector<2x128xf32> -> vector<2x128xf32>
    %162 = arith.addf %158, %161 : vector<2x128xf32>
    %163 = arith.negf %162 : vector<2x128xf32>
    %164 = math.exp %163 : vector<2x128xf32>
    %cst_69 = arith.constant 1.000000e+00 : f32
    %165 = vector.broadcast %cst_69 : f32 to vector<2x128xf32>
    %166 = arith.addf %165, %164 : vector<2x128xf32>
    %167 = arith.divf %165, %166 : vector<2x128xf32>
    %168 = math.tanh %162 : vector<2x128xf32>
    %169 = vector.extract_strided_slice %167 {offsets = [0, 0], sizes = [2, 32], strides = [1, 1]} : vector<2x128xf32> to vector<2x32xf32>
    %170 = vector.extract_strided_slice %167 {offsets = [0, 32], sizes = [2, 32], strides = [1, 1]} : vector<2x128xf32> to vector<2x32xf32>
    %171 = vector.extract_strided_slice %168 {offsets = [0, 64], sizes = [2, 32], strides = [1, 1]} : vector<2x128xf32> to vector<2x32xf32>
    %172 = vector.extract_strided_slice %167 {offsets = [0, 96], sizes = [2, 32], strides = [1, 1]} : vector<2x128xf32> to vector<2x32xf32>
    %173 = arith.mulf %170, %129 : vector<2x32xf32>
    %174 = arith.mulf %169, %171 : vector<2x32xf32>
    %175 = arith.addf %173, %174 : vector<2x32xf32>
    %176 = math.tanh %175 : vector<2x32xf32>
    %177 = arith.mulf %172, %176 : vector<2x32xf32>
    %178 = vector.extract_strided_slice %15 {offsets = [0, 512], sizes = [2, 128], strides = [1, 1]} : vector<2x1024xf32> to vector<2x128xf32>
    %c0_70 = arith.constant 0 : index
    %c0_71 = arith.constant 0 : index
    %c0_72 = arith.constant 0 : index
    %179 = vector.load %arg6[%c0_70, %c0_71, %c0_72] : memref<2x32x128xf32, #tpu.memory_space<vmem>>, vector<1x32x128xf32>
    %180 = vector.shape_cast %179 : vector<1x32x128xf32> to vector<32x128xf32>
    %cst_73 = arith.constant dense<0.000000e+00> : vector<2x128xf32>
    %181 = tpu.matmul %151, %180, %cst_73 {dimension_numbers = #tpu.dot_dimension_numbers<[1], [0], [0], [1], [0, 0, 1, 1], [], []>} : vector<2x32xf32>, vector<32x128xf32>, vector<2x128xf32> -> vector<2x128xf32>
    %182 = arith.addf %178, %181 : vector<2x128xf32>
    %183 = arith.negf %182 : vector<2x128xf32>
    %184 = math.exp %183 : vector<2x128xf32>
    %cst_74 = arith.constant 1.000000e+00 : f32
    %185 = vector.broadcast %cst_74 : f32 to vector<2x128xf32>
    %186 = arith.addf %185, %184 : vector<2x128xf32>
    %187 = arith.divf %185, %186 : vector<2x128xf32>
    %188 = math.tanh %182 : vector<2x128xf32>
    %189 = vector.extract_strided_slice %187 {offsets = [0, 0], sizes = [2, 32], strides = [1, 1]} : vector<2x128xf32> to vector<2x32xf32>
    %190 = vector.extract_strided_slice %187 {offsets = [0, 32], sizes = [2, 32], strides = [1, 1]} : vector<2x128xf32> to vector<2x32xf32>
    %191 = vector.extract_strided_slice %188 {offsets = [0, 64], sizes = [2, 32], strides = [1, 1]} : vector<2x128xf32> to vector<2x32xf32>
    %192 = vector.extract_strided_slice %187 {offsets = [0, 96], sizes = [2, 32], strides = [1, 1]} : vector<2x128xf32> to vector<2x32xf32>
    %193 = arith.mulf %190, %149 : vector<2x32xf32>
    %194 = arith.mulf %189, %191 : vector<2x32xf32>
    %195 = arith.addf %193, %194 : vector<2x32xf32>
    %196 = math.tanh %195 : vector<2x32xf32>
    %197 = arith.mulf %192, %196 : vector<2x32xf32>
    %c1_75 = arith.constant 1 : index
    %c0_76 = arith.constant 0 : index
    %c0_77 = arith.constant 0 : index
    %198 = vector.load %arg5[%c1_75, %c0_76, %c0_77] : memref<2x32x128xf32, #tpu.memory_space<vmem>>, vector<1x32x128xf32>
    %199 = vector.shape_cast %198 : vector<1x32x128xf32> to vector<32x128xf32>
    %cst_78 = arith.constant dense<0.000000e+00> : vector<2x128xf32>
    %200 = tpu.matmul %151, %199, %cst_78 {dimension_numbers = #tpu.dot_dimension_numbers<[1], [0], [0], [1], [0, 0, 1, 1], [], []>} : vector<2x32xf32>, vector<32x128xf32>, vector<2x128xf32> -> vector<2x128xf32>
    %c1_79 = arith.constant 1 : index
    %c0_80 = arith.constant 0 : index
    %c0_81 = arith.constant 0 : index
    %201 = vector.load %arg7[%c1_79, %c0_80, %c0_81] : memref<2x1x128xf32, #tpu.memory_space<vmem>>, vector<1x1x128xf32>
    %202 = vector.shape_cast %201 : vector<1x1x128xf32> to vector<1x128xf32>
    %203 = vector.broadcast %202 : vector<1x128xf32> to vector<2x128xf32>
    %204 = arith.addf %200, %203 : vector<2x128xf32>
    %c1_82 = arith.constant 1 : index
    %c0_83 = arith.constant 0 : index
    %c0_84 = arith.constant 0 : index
    %205 = vector.load %arg6[%c1_82, %c0_83, %c0_84] : memref<2x32x128xf32, #tpu.memory_space<vmem>>, vector<1x32x128xf32>
    %206 = vector.shape_cast %205 : vector<1x32x128xf32> to vector<32x128xf32>
    %cst_85 = arith.constant dense<0.000000e+00> : vector<2x128xf32>
    %207 = tpu.matmul %177, %206, %cst_85 {dimension_numbers = #tpu.dot_dimension_numbers<[1], [0], [0], [1], [0, 0, 1, 1], [], []>} : vector<2x32xf32>, vector<32x128xf32>, vector<2x128xf32> -> vector<2x128xf32>
    %208 = arith.addf %204, %207 : vector<2x128xf32>
    %209 = arith.negf %208 : vector<2x128xf32>
    %210 = math.exp %209 : vector<2x128xf32>
    %cst_86 = arith.constant 1.000000e+00 : f32
    %211 = vector.broadcast %cst_86 : f32 to vector<2x128xf32>
    %212 = arith.addf %211, %210 : vector<2x128xf32>
    %213 = arith.divf %211, %212 : vector<2x128xf32>
    %214 = math.tanh %208 : vector<2x128xf32>
    %215 = vector.extract_strided_slice %213 {offsets = [0, 0], sizes = [2, 32], strides = [1, 1]} : vector<2x128xf32> to vector<2x32xf32>
    %216 = vector.extract_strided_slice %213 {offsets = [0, 32], sizes = [2, 32], strides = [1, 1]} : vector<2x128xf32> to vector<2x32xf32>
    %217 = vector.extract_strided_slice %214 {offsets = [0, 64], sizes = [2, 32], strides = [1, 1]} : vector<2x128xf32> to vector<2x32xf32>
    %218 = vector.extract_strided_slice %213 {offsets = [0, 96], sizes = [2, 32], strides = [1, 1]} : vector<2x128xf32> to vector<2x32xf32>
    %219 = arith.mulf %216, %175 : vector<2x32xf32>
    %220 = arith.mulf %215, %217 : vector<2x32xf32>
    %221 = arith.addf %219, %220 : vector<2x32xf32>
    %222 = math.tanh %221 : vector<2x32xf32>
    %223 = arith.mulf %218, %222 : vector<2x32xf32>
    %224 = vector.extract_strided_slice %15 {offsets = [0, 640], sizes = [2, 128], strides = [1, 1]} : vector<2x1024xf32> to vector<2x128xf32>
    %c0_87 = arith.constant 0 : index
    %c0_88 = arith.constant 0 : index
    %c0_89 = arith.constant 0 : index
    %225 = vector.load %arg6[%c0_87, %c0_88, %c0_89] : memref<2x32x128xf32, #tpu.memory_space<vmem>>, vector<1x32x128xf32>
    %226 = vector.shape_cast %225 : vector<1x32x128xf32> to vector<32x128xf32>
    %cst_90 = arith.constant dense<0.000000e+00> : vector<2x128xf32>
    %227 = tpu.matmul %197, %226, %cst_90 {dimension_numbers = #tpu.dot_dimension_numbers<[1], [0], [0], [1], [0, 0, 1, 1], [], []>} : vector<2x32xf32>, vector<32x128xf32>, vector<2x128xf32> -> vector<2x128xf32>
    %228 = arith.addf %224, %227 : vector<2x128xf32>
    %229 = arith.negf %228 : vector<2x128xf32>
    %230 = math.exp %229 : vector<2x128xf32>
    %cst_91 = arith.constant 1.000000e+00 : f32
    %231 = vector.broadcast %cst_91 : f32 to vector<2x128xf32>
    %232 = arith.addf %231, %230 : vector<2x128xf32>
    %233 = arith.divf %231, %232 : vector<2x128xf32>
    %234 = math.tanh %228 : vector<2x128xf32>
    %235 = vector.extract_strided_slice %233 {offsets = [0, 0], sizes = [2, 32], strides = [1, 1]} : vector<2x128xf32> to vector<2x32xf32>
    %236 = vector.extract_strided_slice %233 {offsets = [0, 32], sizes = [2, 32], strides = [1, 1]} : vector<2x128xf32> to vector<2x32xf32>
    %237 = vector.extract_strided_slice %234 {offsets = [0, 64], sizes = [2, 32], strides = [1, 1]} : vector<2x128xf32> to vector<2x32xf32>
    %238 = vector.extract_strided_slice %233 {offsets = [0, 96], sizes = [2, 32], strides = [1, 1]} : vector<2x128xf32> to vector<2x32xf32>
    %239 = arith.mulf %236, %195 : vector<2x32xf32>
    %240 = arith.mulf %235, %237 : vector<2x32xf32>
    %241 = arith.addf %239, %240 : vector<2x32xf32>
    %242 = math.tanh %241 : vector<2x32xf32>
    %243 = arith.mulf %238, %242 : vector<2x32xf32>
    %c1_92 = arith.constant 1 : index
    %c0_93 = arith.constant 0 : index
    %c0_94 = arith.constant 0 : index
    %244 = vector.load %arg5[%c1_92, %c0_93, %c0_94] : memref<2x32x128xf32, #tpu.memory_space<vmem>>, vector<1x32x128xf32>
    %245 = vector.shape_cast %244 : vector<1x32x128xf32> to vector<32x128xf32>
    %cst_95 = arith.constant dense<0.000000e+00> : vector<2x128xf32>
    %246 = tpu.matmul %197, %245, %cst_95 {dimension_numbers = #tpu.dot_dimension_numbers<[1], [0], [0], [1], [0, 0, 1, 1], [], []>} : vector<2x32xf32>, vector<32x128xf32>, vector<2x128xf32> -> vector<2x128xf32>
    %c1_96 = arith.constant 1 : index
    %c0_97 = arith.constant 0 : index
    %c0_98 = arith.constant 0 : index
    %247 = vector.load %arg7[%c1_96, %c0_97, %c0_98] : memref<2x1x128xf32, #tpu.memory_space<vmem>>, vector<1x1x128xf32>
    %248 = vector.shape_cast %247 : vector<1x1x128xf32> to vector<1x128xf32>
    %249 = vector.broadcast %248 : vector<1x128xf32> to vector<2x128xf32>
    %250 = arith.addf %246, %249 : vector<2x128xf32>
    %c1_99 = arith.constant 1 : index
    %c0_100 = arith.constant 0 : index
    %c0_101 = arith.constant 0 : index
    %251 = vector.load %arg6[%c1_99, %c0_100, %c0_101] : memref<2x32x128xf32, #tpu.memory_space<vmem>>, vector<1x32x128xf32>
    %252 = vector.shape_cast %251 : vector<1x32x128xf32> to vector<32x128xf32>
    %cst_102 = arith.constant dense<0.000000e+00> : vector<2x128xf32>
    %253 = tpu.matmul %223, %252, %cst_102 {dimension_numbers = #tpu.dot_dimension_numbers<[1], [0], [0], [1], [0, 0, 1, 1], [], []>} : vector<2x32xf32>, vector<32x128xf32>, vector<2x128xf32> -> vector<2x128xf32>
    %254 = arith.addf %250, %253 : vector<2x128xf32>
    %255 = arith.negf %254 : vector<2x128xf32>
    %256 = math.exp %255 : vector<2x128xf32>
    %cst_103 = arith.constant 1.000000e+00 : f32
    %257 = vector.broadcast %cst_103 : f32 to vector<2x128xf32>
    %258 = arith.addf %257, %256 : vector<2x128xf32>
    %259 = arith.divf %257, %258 : vector<2x128xf32>
    %260 = math.tanh %254 : vector<2x128xf32>
    %261 = vector.extract_strided_slice %259 {offsets = [0, 0], sizes = [2, 32], strides = [1, 1]} : vector<2x128xf32> to vector<2x32xf32>
    %262 = vector.extract_strided_slice %259 {offsets = [0, 32], sizes = [2, 32], strides = [1, 1]} : vector<2x128xf32> to vector<2x32xf32>
    %263 = vector.extract_strided_slice %260 {offsets = [0, 64], sizes = [2, 32], strides = [1, 1]} : vector<2x128xf32> to vector<2x32xf32>
    %264 = vector.extract_strided_slice %259 {offsets = [0, 96], sizes = [2, 32], strides = [1, 1]} : vector<2x128xf32> to vector<2x32xf32>
    %265 = arith.mulf %262, %221 : vector<2x32xf32>
    %266 = arith.mulf %261, %263 : vector<2x32xf32>
    %267 = arith.addf %265, %266 : vector<2x32xf32>
    %268 = math.tanh %267 : vector<2x32xf32>
    %269 = arith.mulf %264, %268 : vector<2x32xf32>
    %270 = vector.extract_strided_slice %15 {offsets = [0, 768], sizes = [2, 128], strides = [1, 1]} : vector<2x1024xf32> to vector<2x128xf32>
    %c0_104 = arith.constant 0 : index
    %c0_105 = arith.constant 0 : index
    %c0_106 = arith.constant 0 : index
    %271 = vector.load %arg6[%c0_104, %c0_105, %c0_106] : memref<2x32x128xf32, #tpu.memory_space<vmem>>, vector<1x32x128xf32>
    %272 = vector.shape_cast %271 : vector<1x32x128xf32> to vector<32x128xf32>
    %cst_107 = arith.constant dense<0.000000e+00> : vector<2x128xf32>
    %273 = tpu.matmul %243, %272, %cst_107 {dimension_numbers = #tpu.dot_dimension_numbers<[1], [0], [0], [1], [0, 0, 1, 1], [], []>} : vector<2x32xf32>, vector<32x128xf32>, vector<2x128xf32> -> vector<2x128xf32>
    %274 = arith.addf %270, %273 : vector<2x128xf32>
    %275 = arith.negf %274 : vector<2x128xf32>
    %276 = math.exp %275 : vector<2x128xf32>
    %cst_108 = arith.constant 1.000000e+00 : f32
    %277 = vector.broadcast %cst_108 : f32 to vector<2x128xf32>
    %278 = arith.addf %277, %276 : vector<2x128xf32>
    %279 = arith.divf %277, %278 : vector<2x128xf32>
    %280 = math.tanh %274 : vector<2x128xf32>
    %281 = vector.extract_strided_slice %279 {offsets = [0, 0], sizes = [2, 32], strides = [1, 1]} : vector<2x128xf32> to vector<2x32xf32>
    %282 = vector.extract_strided_slice %279 {offsets = [0, 32], sizes = [2, 32], strides = [1, 1]} : vector<2x128xf32> to vector<2x32xf32>
    %283 = vector.extract_strided_slice %280 {offsets = [0, 64], sizes = [2, 32], strides = [1, 1]} : vector<2x128xf32> to vector<2x32xf32>
    %284 = vector.extract_strided_slice %279 {offsets = [0, 96], sizes = [2, 32], strides = [1, 1]} : vector<2x128xf32> to vector<2x32xf32>
    %285 = arith.mulf %282, %241 : vector<2x32xf32>
    %286 = arith.mulf %281, %283 : vector<2x32xf32>
    %287 = arith.addf %285, %286 : vector<2x32xf32>
    %288 = math.tanh %287 : vector<2x32xf32>
    %289 = arith.mulf %284, %288 : vector<2x32xf32>
    %c1_109 = arith.constant 1 : index
    %c0_110 = arith.constant 0 : index
    %c0_111 = arith.constant 0 : index
    %290 = vector.load %arg5[%c1_109, %c0_110, %c0_111] : memref<2x32x128xf32, #tpu.memory_space<vmem>>, vector<1x32x128xf32>
    %291 = vector.shape_cast %290 : vector<1x32x128xf32> to vector<32x128xf32>
    %cst_112 = arith.constant dense<0.000000e+00> : vector<2x128xf32>
    %292 = tpu.matmul %243, %291, %cst_112 {dimension_numbers = #tpu.dot_dimension_numbers<[1], [0], [0], [1], [0, 0, 1, 1], [], []>} : vector<2x32xf32>, vector<32x128xf32>, vector<2x128xf32> -> vector<2x128xf32>
    %c1_113 = arith.constant 1 : index
    %c0_114 = arith.constant 0 : index
    %c0_115 = arith.constant 0 : index
    %293 = vector.load %arg7[%c1_113, %c0_114, %c0_115] : memref<2x1x128xf32, #tpu.memory_space<vmem>>, vector<1x1x128xf32>
    %294 = vector.shape_cast %293 : vector<1x1x128xf32> to vector<1x128xf32>
    %295 = vector.broadcast %294 : vector<1x128xf32> to vector<2x128xf32>
    %296 = arith.addf %292, %295 : vector<2x128xf32>
    %c1_116 = arith.constant 1 : index
    %c0_117 = arith.constant 0 : index
    %c0_118 = arith.constant 0 : index
    %297 = vector.load %arg6[%c1_116, %c0_117, %c0_118] : memref<2x32x128xf32, #tpu.memory_space<vmem>>, vector<1x32x128xf32>
    %298 = vector.shape_cast %297 : vector<1x32x128xf32> to vector<32x128xf32>
    %cst_119 = arith.constant dense<0.000000e+00> : vector<2x128xf32>
    %299 = tpu.matmul %269, %298, %cst_119 {dimension_numbers = #tpu.dot_dimension_numbers<[1], [0], [0], [1], [0, 0, 1, 1], [], []>} : vector<2x32xf32>, vector<32x128xf32>, vector<2x128xf32> -> vector<2x128xf32>
    %300 = arith.addf %296, %299 : vector<2x128xf32>
    %301 = arith.negf %300 : vector<2x128xf32>
    %302 = math.exp %301 : vector<2x128xf32>
    %cst_120 = arith.constant 1.000000e+00 : f32
    %303 = vector.broadcast %cst_120 : f32 to vector<2x128xf32>
    %304 = arith.addf %303, %302 : vector<2x128xf32>
    %305 = arith.divf %303, %304 : vector<2x128xf32>
    %306 = math.tanh %300 : vector<2x128xf32>
    %307 = vector.extract_strided_slice %305 {offsets = [0, 0], sizes = [2, 32], strides = [1, 1]} : vector<2x128xf32> to vector<2x32xf32>
    %308 = vector.extract_strided_slice %305 {offsets = [0, 32], sizes = [2, 32], strides = [1, 1]} : vector<2x128xf32> to vector<2x32xf32>
    %309 = vector.extract_strided_slice %306 {offsets = [0, 64], sizes = [2, 32], strides = [1, 1]} : vector<2x128xf32> to vector<2x32xf32>
    %310 = vector.extract_strided_slice %305 {offsets = [0, 96], sizes = [2, 32], strides = [1, 1]} : vector<2x128xf32> to vector<2x32xf32>
    %311 = arith.mulf %308, %267 : vector<2x32xf32>
    %312 = arith.mulf %307, %309 : vector<2x32xf32>
    %313 = arith.addf %311, %312 : vector<2x32xf32>
    %314 = math.tanh %313 : vector<2x32xf32>
    %315 = arith.mulf %310, %314 : vector<2x32xf32>
    %316 = vector.extract_strided_slice %15 {offsets = [0, 896], sizes = [2, 128], strides = [1, 1]} : vector<2x1024xf32> to vector<2x128xf32>
    %c0_121 = arith.constant 0 : index
    %c0_122 = arith.constant 0 : index
    %c0_123 = arith.constant 0 : index
    %317 = vector.load %arg6[%c0_121, %c0_122, %c0_123] : memref<2x32x128xf32, #tpu.memory_space<vmem>>, vector<1x32x128xf32>
    %318 = vector.shape_cast %317 : vector<1x32x128xf32> to vector<32x128xf32>
    %cst_124 = arith.constant dense<0.000000e+00> : vector<2x128xf32>
    %319 = tpu.matmul %289, %318, %cst_124 {dimension_numbers = #tpu.dot_dimension_numbers<[1], [0], [0], [1], [0, 0, 1, 1], [], []>} : vector<2x32xf32>, vector<32x128xf32>, vector<2x128xf32> -> vector<2x128xf32>
    %320 = arith.addf %316, %319 : vector<2x128xf32>
    %321 = arith.negf %320 : vector<2x128xf32>
    %322 = math.exp %321 : vector<2x128xf32>
    %cst_125 = arith.constant 1.000000e+00 : f32
    %323 = vector.broadcast %cst_125 : f32 to vector<2x128xf32>
    %324 = arith.addf %323, %322 : vector<2x128xf32>
    %325 = arith.divf %323, %324 : vector<2x128xf32>
    %326 = math.tanh %320 : vector<2x128xf32>
    %327 = vector.extract_strided_slice %325 {offsets = [0, 0], sizes = [2, 32], strides = [1, 1]} : vector<2x128xf32> to vector<2x32xf32>
    %328 = vector.extract_strided_slice %325 {offsets = [0, 32], sizes = [2, 32], strides = [1, 1]} : vector<2x128xf32> to vector<2x32xf32>
    %329 = vector.extract_strided_slice %326 {offsets = [0, 64], sizes = [2, 32], strides = [1, 1]} : vector<2x128xf32> to vector<2x32xf32>
    %330 = vector.extract_strided_slice %325 {offsets = [0, 96], sizes = [2, 32], strides = [1, 1]} : vector<2x128xf32> to vector<2x32xf32>
    %331 = arith.mulf %328, %287 : vector<2x32xf32>
    %332 = arith.mulf %327, %329 : vector<2x32xf32>
    %333 = arith.addf %331, %332 : vector<2x32xf32>
    %334 = math.tanh %333 : vector<2x32xf32>
    %335 = arith.mulf %330, %334 : vector<2x32xf32>
    %c1_126 = arith.constant 1 : index
    %c0_127 = arith.constant 0 : index
    %c0_128 = arith.constant 0 : index
    %336 = vector.load %arg5[%c1_126, %c0_127, %c0_128] : memref<2x32x128xf32, #tpu.memory_space<vmem>>, vector<1x32x128xf32>
    %337 = vector.shape_cast %336 : vector<1x32x128xf32> to vector<32x128xf32>
    %cst_129 = arith.constant dense<0.000000e+00> : vector<2x128xf32>
    %338 = tpu.matmul %289, %337, %cst_129 {dimension_numbers = #tpu.dot_dimension_numbers<[1], [0], [0], [1], [0, 0, 1, 1], [], []>} : vector<2x32xf32>, vector<32x128xf32>, vector<2x128xf32> -> vector<2x128xf32>
    %c1_130 = arith.constant 1 : index
    %c0_131 = arith.constant 0 : index
    %c0_132 = arith.constant 0 : index
    %339 = vector.load %arg7[%c1_130, %c0_131, %c0_132] : memref<2x1x128xf32, #tpu.memory_space<vmem>>, vector<1x1x128xf32>
    %340 = vector.shape_cast %339 : vector<1x1x128xf32> to vector<1x128xf32>
    %341 = vector.broadcast %340 : vector<1x128xf32> to vector<2x128xf32>
    %342 = arith.addf %338, %341 : vector<2x128xf32>
    %c1_133 = arith.constant 1 : index
    %c0_134 = arith.constant 0 : index
    %c0_135 = arith.constant 0 : index
    %343 = vector.load %arg6[%c1_133, %c0_134, %c0_135] : memref<2x32x128xf32, #tpu.memory_space<vmem>>, vector<1x32x128xf32>
    %344 = vector.shape_cast %343 : vector<1x32x128xf32> to vector<32x128xf32>
    %cst_136 = arith.constant dense<0.000000e+00> : vector<2x128xf32>
    %345 = tpu.matmul %315, %344, %cst_136 {dimension_numbers = #tpu.dot_dimension_numbers<[1], [0], [0], [1], [0, 0, 1, 1], [], []>} : vector<2x32xf32>, vector<32x128xf32>, vector<2x128xf32> -> vector<2x128xf32>
    %346 = arith.addf %342, %345 : vector<2x128xf32>
    %347 = arith.negf %346 : vector<2x128xf32>
    %348 = math.exp %347 : vector<2x128xf32>
    %cst_137 = arith.constant 1.000000e+00 : f32
    %349 = vector.broadcast %cst_137 : f32 to vector<2x128xf32>
    %350 = arith.addf %349, %348 : vector<2x128xf32>
    %351 = arith.divf %349, %350 : vector<2x128xf32>
    %352 = math.tanh %346 : vector<2x128xf32>
    %353 = vector.extract_strided_slice %351 {offsets = [0, 0], sizes = [2, 32], strides = [1, 1]} : vector<2x128xf32> to vector<2x32xf32>
    %354 = vector.extract_strided_slice %351 {offsets = [0, 32], sizes = [2, 32], strides = [1, 1]} : vector<2x128xf32> to vector<2x32xf32>
    %355 = vector.extract_strided_slice %352 {offsets = [0, 64], sizes = [2, 32], strides = [1, 1]} : vector<2x128xf32> to vector<2x32xf32>
    %356 = vector.extract_strided_slice %351 {offsets = [0, 96], sizes = [2, 32], strides = [1, 1]} : vector<2x128xf32> to vector<2x32xf32>
    %357 = arith.mulf %354, %313 : vector<2x32xf32>
    %358 = arith.mulf %353, %355 : vector<2x32xf32>
    %359 = arith.addf %357, %358 : vector<2x32xf32>
    %360 = math.tanh %359 : vector<2x32xf32>
    %361 = arith.mulf %356, %360 : vector<2x32xf32>
    %c1_138 = arith.constant 1 : index
    %c0_139 = arith.constant 0 : index
    %c0_140 = arith.constant 0 : index
    %362 = vector.load %arg5[%c1_138, %c0_139, %c0_140] : memref<2x32x128xf32, #tpu.memory_space<vmem>>, vector<1x32x128xf32>
    %363 = vector.shape_cast %362 : vector<1x32x128xf32> to vector<32x128xf32>
    %cst_141 = arith.constant dense<0.000000e+00> : vector<2x128xf32>
    %364 = tpu.matmul %335, %363, %cst_141 {dimension_numbers = #tpu.dot_dimension_numbers<[1], [0], [0], [1], [0, 0, 1, 1], [], []>} : vector<2x32xf32>, vector<32x128xf32>, vector<2x128xf32> -> vector<2x128xf32>
    %c1_142 = arith.constant 1 : index
    %c0_143 = arith.constant 0 : index
    %c0_144 = arith.constant 0 : index
    %365 = vector.load %arg7[%c1_142, %c0_143, %c0_144] : memref<2x1x128xf32, #tpu.memory_space<vmem>>, vector<1x1x128xf32>
    %366 = vector.shape_cast %365 : vector<1x1x128xf32> to vector<1x128xf32>
    %367 = vector.broadcast %366 : vector<1x128xf32> to vector<2x128xf32>
    %368 = arith.addf %364, %367 : vector<2x128xf32>
    %c1_145 = arith.constant 1 : index
    %c0_146 = arith.constant 0 : index
    %c0_147 = arith.constant 0 : index
    %369 = vector.load %arg6[%c1_145, %c0_146, %c0_147] : memref<2x32x128xf32, #tpu.memory_space<vmem>>, vector<1x32x128xf32>
    %370 = vector.shape_cast %369 : vector<1x32x128xf32> to vector<32x128xf32>
    %cst_148 = arith.constant dense<0.000000e+00> : vector<2x128xf32>
    %371 = tpu.matmul %361, %370, %cst_148 {dimension_numbers = #tpu.dot_dimension_numbers<[1], [0], [0], [1], [0, 0, 1, 1], [], []>} : vector<2x32xf32>, vector<32x128xf32>, vector<2x128xf32> -> vector<2x128xf32>
    %372 = arith.addf %368, %371 : vector<2x128xf32>
    %373 = arith.negf %372 : vector<2x128xf32>
    %374 = math.exp %373 : vector<2x128xf32>
    %cst_149 = arith.constant 1.000000e+00 : f32
    %375 = vector.broadcast %cst_149 : f32 to vector<2x128xf32>
    %376 = arith.addf %375, %374 : vector<2x128xf32>
    %377 = arith.divf %375, %376 : vector<2x128xf32>
    %378 = math.tanh %372 : vector<2x128xf32>
    %379 = vector.extract_strided_slice %377 {offsets = [0, 0], sizes = [2, 32], strides = [1, 1]} : vector<2x128xf32> to vector<2x32xf32>
    %380 = vector.extract_strided_slice %377 {offsets = [0, 32], sizes = [2, 32], strides = [1, 1]} : vector<2x128xf32> to vector<2x32xf32>
    %381 = vector.extract_strided_slice %378 {offsets = [0, 64], sizes = [2, 32], strides = [1, 1]} : vector<2x128xf32> to vector<2x32xf32>
    %382 = vector.extract_strided_slice %377 {offsets = [0, 96], sizes = [2, 32], strides = [1, 1]} : vector<2x128xf32> to vector<2x32xf32>
    %383 = arith.mulf %380, %359 : vector<2x32xf32>
    %384 = arith.mulf %379, %381 : vector<2x32xf32>
    %385 = arith.addf %383, %384 : vector<2x32xf32>
    %386 = math.tanh %385 : vector<2x32xf32>
    %387 = arith.mulf %382, %386 : vector<2x32xf32>
    %c0_150 = arith.constant 0 : index
    %c0_151 = arith.constant 0 : index
    %388 = vector.load %arg8[%c0_150, %c0_151] : memref<32x4xf32, #tpu.memory_space<vmem>>, vector<32x4xf32>
    %cst_152 = arith.constant dense<0.000000e+00> : vector<2x4xf32>
    %389 = tpu.matmul %387, %388, %cst_152 {dimension_numbers = #tpu.dot_dimension_numbers<[1], [0], [0], [1], [0, 0, 1, 1], [], []>} : vector<2x32xf32>, vector<32x4xf32>, vector<2x4xf32> -> vector<2x4xf32>
    %c0_153 = arith.constant 0 : index
    %c0_154 = arith.constant 0 : index
    %390 = vector.load %arg9[%c0_153, %c0_154] : memref<1x4xf32, #tpu.memory_space<vmem>>, vector<1x4xf32>
    %391 = vector.broadcast %390 : vector<1x4xf32> to vector<2x4xf32>
    %392 = arith.addf %389, %391 : vector<2x4xf32>
    %c0_155 = arith.constant 0 : index
    %c0_156 = arith.constant 0 : index
    %393 = vector.load %arg10[%c0_155, %c0_156] : memref<2x4xf32, #tpu.memory_space<vmem>>, vector<2x4xf32>
    tpu.vector_store %arg10[%c0_155, %c0_156], %392 {strides = array<i32>} : memref<2x4xf32, #tpu.memory_space<vmem>>, vector<2x4xf32>,
    return
  }
}

</mosaic_0001>

<llo_original>
// kernel: fwd.1
$region0: #{fwd.1}
  #allocation0 [shape = 'u32[]', space=smem, size = 0x4, offset = 0x4, fixed_abs, tag = 'smem constant byte address 0x4 - core index']
  #allocation1 [shape = 'u32[72,128]{1,0:T(1,128)}', space=vmem, size = 0x9000, scoped, tag = 'internal scratch']
  %s0 = inlined_call_operand.vmem [shape: f32[2,32], index: 0, kind: input, shape index: {}]
  %s1 = inlined_call_operand.hbm [shape: f32[32,256], index: 1, kind: input, shape index: {}]
  %s2 = inlined_call_operand.vmem [shape: f32[1,256], index: 2, kind: input, shape index: {}]
  %s3 = inlined_call_operand.hbm [shape: f32[256,1024], index: 3, kind: input, shape index: {}]
  %s4 = inlined_call_operand.vmem [shape: f32[1,1024], index: 4, kind: input, shape index: {}]
  %s5 = inlined_call_operand.hbm [shape: f32[2,32,128], index: 5, kind: input, shape index: {}]
  %s6 = inlined_call_operand.hbm [shape: f32[2,32,128], index: 6, kind: input, shape index: {}]
  %s7 = inlined_call_operand.vmem [shape: f32[2,1,128], index: 7, kind: input, shape index: {}]
  %s8 = inlined_call_operand.vmem [shape: f32[32,4], index: 8, kind: input, shape index: {}]
  %s9 = inlined_call_operand.vmem [shape: f32[1,4], index: 9, kind: input, shape index: {}]
  %s10 = inlined_call_operand.hbm [shape: f32[2,4], index: 10, kind: output, shape index: {}]
  %s11 = sld [smem:[#allocation0]]
  $region66: #{fwd.1} parent=0
    _
  %s13 = ssub.s32 1, %s11
  %s14 = scalar_select 0, %s13, %s11
  $region1: #{fwd.1} parent=0
    #allocation2 [shape = 'u8[32768]{0}', space=vmem, size = 0x8000, scoped, tag = 'input window, operand 1, single buffered']
    #allocation3 [shape = 's32[1]{0}', space=sflag, size = 0x4, scoped, tag = 'scoped memory for fwd.1']
    #allocation4 [shape = 's32[1]{0}', space=sflag, size = 0x4, scoped, tag = 'scoped memory for fwd.1']
    #allocation5 [shape = 'u8[1048576]{0}', space=vmem, size = 0x100000, scoped, tag = 'input window, operand 3, single buffered']
    #allocation6 [shape = 's32[1]{0}', space=sflag, size = 0x4, scoped, tag = 'scoped memory for fwd.1']
    #allocation7 [shape = 'u8[32768]{0}', space=vmem, size = 0x8000, scoped, tag = 'input window, operand 5, single buffered']
    #allocation8 [shape = 'u8[32768]{0}', space=vmem, size = 0x8000, scoped, tag = 'input window, operand 6, single buffered']
    #allocation9 [shape = 's32[1]{0}', space=sflag, size = 0x4, scoped, tag = 'scoped memory for fwd.1']
    #allocation10 [shape = 'u8[1024]{0}', space=vmem, size = 0x400, scoped, tag = 'output window, operand 0, single buffered']
    %15 = vsyncpa [#allocation3], 0
    %16 = vsyncpa [#allocation6], 0
    %17 = vsyncpa [#allocation9], 0
    %18 = vsyncpa [#allocation4], 0
    // Predicated region
    $region2: #{fwd.1} parent=1 // pred_check
      _
    $region3: #{fwd.1} parent=1 // pred_check_branch
      %20 = sbr.rel (0) target = $region5
    $region4: #{fwd.1} parent=1 // pred_region
      _
    $region5: #{fwd.1} parent=1 // pred_fallthru
      _
    // Predicated region
    $region6: #{fwd.1} parent=1 // pred_check
      _
    $region7: #{fwd.1} parent=1 // pred_check_branch
      %22 = sbr.rel (0) target = $region9
    $region8: #{fwd.1} parent=1 // pred_region
      %24 = vsyncadd [#allocation3], 0
      %s25 = sshll.u32 %s1, 4
      %s26 = int_to_ptr.hbm [resolvable:$true] %s25
      %s27 = sshll.u32 [#allocation2], 4
      %s28 = int_to_ptr.vmem [resolvable:$true] %s27
      %33 = dma.hbm_to_vmem [thread:$0]  %s26, 1024, %s28, [#allocation3], 256, 256, 16
    $region9: #{fwd.1} parent=1 // pred_fallthru
      _
    // Predicated region
    $region10: #{fwd.1} parent=1 // pred_check
      _
    $region11: #{fwd.1} parent=1 // pred_check_branch
      %35 = sbr.rel (0) target = $region13
    $region12: #{fwd.1} parent=1 // pred_region
      _
    $region13: #{fwd.1} parent=1 // pred_fallthru
      _
    // Predicated region
    $region14: #{fwd.1} parent=1 // pred_check
      _
    $region15: #{fwd.1} parent=1 // pred_check_branch
      %37 = sbr.rel (0) target = $region17
    $region16: #{fwd.1} parent=1 // pred_region
      %39 = vsyncadd [#allocation6], 0
      %s40 = sshll.u32 %s3, 4
      %s41 = int_to_ptr.hbm [resolvable:$true] %s40
      %s42 = sshll.u32 [#allocation5], 4
      %s43 = int_to_ptr.vmem [resolvable:$true] %s42
      %48 = dma.hbm_to_vmem [thread:$0]  %s41, 32768, %s43, [#allocation6], 1024, 1024, 64
    $region17: #{fwd.1} parent=1 // pred_fallthru
      _
    // Predicated region
    $region18: #{fwd.1} parent=1 // pred_check
      _
    $region19: #{fwd.1} parent=1 // pred_check_branch
      %50 = sbr.rel (0) target = $region21
    $region20: #{fwd.1} parent=1 // pred_region
      _
    $region21: #{fwd.1} parent=1 // pred_fallthru
      _
    // Predicated region
    $region22: #{fwd.1} parent=1 // pred_check
      _
    $region23: #{fwd.1} parent=1 // pred_check_branch
      %52 = sbr.rel (0) target = $region25
    $region24: #{fwd.1} parent=1 // pred_region
      %54 = vsyncadd [#allocation6], 0
      %s55 = sshll.u32 %s5, 4
      %s56 = int_to_ptr.hbm [resolvable:$true] %s55
      %s57 = sshll.u32 [#allocation7], 4
      %s58 = int_to_ptr.vmem [resolvable:$true] %s57
      %63 = dma.hbm_to_vmem [thread:$0]  %s56, 1024, %s58, [#allocation6], 128, 128, 8
    $region25: #{fwd.1} parent=1 // pred_fallthru
      _
    // Predicated region
    $region26: #{fwd.1} parent=1 // pred_check
      _
    $region27: #{fwd.1} parent=1 // pred_check_branch
      %65 = sbr.rel (0) target = $region29
    $region28: #{fwd.1} parent=1 // pred_region
      %67 = vsyncadd [#allocation9], 0
      %s68 = sshll.u32 %s6, 4
      %s69 = int_to_ptr.hbm [resolvable:$true] %s68
      %s70 = sshll.u32 [#allocation8], 4
      %s71 = int_to_ptr.vmem [resolvable:$true] %s70
      %76 = dma.hbm_to_vmem [thread:$0]  %s69, 1024, %s71, [#allocation9], 128, 128, 8
    $region29: #{fwd.1} parent=1 // pred_fallthru
      _
    // Predicated region
    $region30: #{fwd.1} parent=1 // pred_check
      _
    $region31: #{fwd.1} parent=1 // pred_check_branch
      %78 = sbr.rel (0) target = $region33
    $region32: #{fwd.1} parent=1 // pred_region
      _
    $region33: #{fwd.1} parent=1 // pred_fallthru
      _
    // Predicated region
    $region34: #{fwd.1} parent=1 // pred_check
      _
    $region35: #{fwd.1} parent=1 // pred_check_branch
      %80 = sbr.rel (0) target = $region37
    $region36: #{fwd.1} parent=1 // pred_region
      _
    $region37: #{fwd.1} parent=1 // pred_fallthru
      _
    // Predicated region
    $region38: #{fwd.1} parent=1 // pred_check
      _
    $region39: #{fwd.1} parent=1 // pred_check_branch
      %82 = sbr.rel (0) target = $region41
    $region40: #{fwd.1} parent=1 // pred_region
      _
    $region41: #{fwd.1} parent=1 // pred_fallthru
      _
    // Predicated region
    $region42: #{fwd.1} parent=1 // pred_check
      _
    $region43: #{fwd.1} parent=1 // pred_check_branch
      %84 = sbr.rel (0) target = $region45
    $region44: #{fwd.1} parent=1 // pred_region
      %86 = dma.done [#allocation3], 1024
    $region45: #{fwd.1} parent=1 // pred_fallthru
      _
    // Predicated region
    $region46: #{fwd.1} parent=1 // pred_check
      _
    $region47: #{fwd.1} parent=1 // pred_check_branch
      %88 = sbr.rel (0) target = $region49
    $region48: #{fwd.1} parent=1 // pred_region
      %90 = dma.done [#allocation6], 32768
    $region49: #{fwd.1} parent=1 // pred_fallthru
      _
    // Predicated region
    $region50: #{fwd.1} parent=1 // pred_check
      _
    $region51: #{fwd.1} parent=1 // pred_check_branch
      %92 = sbr.rel (0) target = $region53
    $region52: #{fwd.1} parent=1 // pred_region
      %94 = dma.done [#allocation6], 1024
    $region53: #{fwd.1} parent=1 // pred_fallthru
      _
    // Predicated region
    $region54: #{fwd.1} parent=1 // pred_check
      _
    $region55: #{fwd.1} parent=1 // pred_check_branch
      %96 = sbr.rel (0) target = $region57
    $region56: #{fwd.1} parent=1 // pred_region
      %98 = dma.done [#allocation9], 1024
    $region57: #{fwd.1} parent=1 // pred_fallthru
      _
    %v99 = vld [vmem:[%s0] sm:$0x3]
    %v100 = vld [vmem:[#allocation2] sm:$0xff]
    %v101 = vld [vmem:[#allocation2 + $0x8] sm:$0xff]
    %v102 = vld [vmem:[#allocation2 + $0x10] sm:$0xff]
    %v103 = vld [vmem:[#allocation2 + $0x18] sm:$0xff]
    %v104 = vld [vmem:[#allocation2 + $0x20] sm:$0xff]
    %v105 = vld [vmem:[#allocation2 + $0x28] sm:$0xff]
    %v106 = vld [vmem:[#allocation2 + $0x30] sm:$0xff]
    %v107 = vld [vmem:[#allocation2 + $0x38] sm:$0xff]
    %v108 = vld [vmem:[%s2] sm:$0x3]
    %v110 = vperm.slane %v108, 0
    %v111 = vperm.slane %v108, 1
    %vm114 = vcmask 261120
    %v116 = vsel %vm114, %v99, 0
    %118 = vmatpush.msra.mxu0 0.0
    %119 = vmatpush.msra.mxu0 0.0
    %120 = vmatpush.msra.mxu0 0.0
    %121 = vmatpush.msra.mxu0 0.0
    %122 = vmatpush.msra.mxu0 0.0
    %123 = vmatpush.msra.mxu0 0.0
    %124 = vmatpush.msra.mxu0 0.0
    %125 = vmatpush.msra.mxu0 0.0
    %126 = vmatpush.msra.mxu0 0.0
    %127 = vmatpush.msra.mxu0 0.0
    %128 = vmatpush.msra.mxu0 0.0
    %129 = vmatpush.msra.mxu0 0.0
    %130 = vmatpush.msra.mxu0 %v106
    %131 = vmatpush.msra.mxu0 %v104
    %132 = vmatpush.msra.mxu0 %v102
    %133 = vmatpush.msra.mxu0 %v100
    %134 = vmatmul.f32.gmra.mxu0 %v116
    %v135 = vpop.f32.mrf.mxu0
    %v136 = vadd.f32 %v110, %v135
    %137 = vdwg.mxu0
    %138 = vmatpush.msra.mxu0 0.0
    %139 = vmatpush.msra.mxu0 0.0
    %140 = vmatpush.msra.mxu0 0.0
    %141 = vmatpush.msra.mxu0 0.0
    %142 = vmatpush.msra.mxu0 0.0
    %143 = vmatpush.msra.mxu0 0.0
    %144 = vmatpush.msra.mxu0 0.0
    %145 = vmatpush.msra.mxu0 0.0
    %146 = vmatpush.msra.mxu0 0.0
    %147 = vmatpush.msra.mxu0 0.0
    %148 = vmatpush.msra.mxu0 0.0
    %149 = vmatpush.msra.mxu0 0.0
    %150 = vmatpush.msra.mxu0 %v107
    %151 = vmatpush.msra.mxu0 %v105
    %152 = vmatpush.msra.mxu0 %v103
    %153 = vmatpush.msra.mxu0 %v101
    %154 = vmatmul.f32.gmra.mxu0 %v116
    %v155 = vpop.f32.mrf.mxu0
    %v156 = vadd.f32 %v111, %v155
    %157 = vdwg.mxu0
    %v158 = vxor.u32 %v136, 2147483648
    %v159 = vxor.u32 %v156, 2147483648
    %v160 = vmul.f32 %v158, 1.442695
    %v161 = vpow.pop %v160
    %v162 = vmul.f32 %v159, 1.442695
    %v163 = vpow.pop %v162
    %v164 = vadd.f32 %v161, 1.0
    %v165 = vadd.f32 %v163, 1.0
    %v166 = vrcp.pop %v164
    %v167 = vmul.f32 %v164, %v166
    %v168 = vsub.f32 1.0, %v167
    %v169 = vmul.f32 %v166, %v168
    %v170 = vadd.f32 %v166, %v169
    %vm171 = vweird.f32 %v164
    %vm172 = vweird.f32 %v166
    %vm173 = vmor %vm171, %vm172
    %v174 = vsel %vm173, %v166, %v170
    %v175 = vand.u32 2147483647, %v164
    %vm176 = vcmp.eq.f32.partialorder %v175, 8.507059e+37
    %v177 = vand.u32 %v164, 2147483648
    %v178 = vor.u32 1.1754944e-38, %v177
    %v179 = vsel %vm176, %v178, %v174
    %v180 = vmul.f32 1.0, %v179
    %v181 = vrcp.pop %v165
    %v182 = vmul.f32 %v165, %v181
    %v183 = vsub.f32 1.0, %v182
    %v184 = vmul.f32 %v181, %v183
    %v185 = vadd.f32 %v181, %v184
    %vm186 = vweird.f32 %v165
    %vm187 = vweird.f32 %v181
    %vm188 = vmor %vm186, %vm187
    %v189 = vsel %vm188, %v181, %v185
    %v190 = vand.u32 2147483647, %v165
    %vm191 = vcmp.eq.f32.partialorder %v190, 8.507059e+37
    %v192 = vand.u32 %v165, 2147483648
    %v193 = vor.u32 1.1754944e-38, %v192
    %v194 = vsel %vm191, %v193, %v189
    %v195 = vmul.f32 1.0, %v194
    %v196 = vld [vmem:[#allocation5] sm:$0xff]
    %v197 = vld [vmem:[#allocation5 + $0x8] sm:$0xff]
    %v198 = vld [vmem:[#allocation5 + $0x10] sm:$0xff]
    %v199 = vld [vmem:[#allocation5 + $0x18] sm:$0xff]
    %v200 = vld [vmem:[#allocation5 + $0x20] sm:$0xff]
    %v201 = vld [vmem:[#allocation5 + $0x28] sm:$0xff]
    %v202 = vld [vmem:[#allocation5 + $0x30] sm:$0xff]
    %v203 = vld [vmem:[#allocation5 + $0x38] sm:$0xff]
    %v204 = vld [vmem:[#allocation5 + $0x40] sm:$0xff]
    %v205 = vld [vmem:[#allocation5 + $0x48] sm:$0xff]
    %v206 = vld [vmem:[#allocation5 + $0x50] sm:$0xff]
    %v207 = vld [vmem:[#allocation5 + $0x58] sm:$0xff]
    %v208 = vld [vmem:[#allocation5 + $0x60] sm:$0xff]
    %v209 = vld [vmem:[#allocation5 + $0x68] sm:$0xff]
    %v210 = vld [vmem:[#allocation5 + $0x70] sm:$0xff]
    %v211 = vld [vmem:[#allocation5 + $0x78] sm:$0xff]
    %v212 = vld [vmem:[#allocation5 + $0x80] sm:$0xff]
    %v213 = vld [vmem:[#allocation5 + $0x88] sm:$0xff]
    %v214 = vld [vmem:[#allocation5 + $0x90] sm:$0xff]
    %v215 = vld [vmem:[#allocation5 + $0x98] sm:$0xff]
    %v216 = vld [vmem:[#allocation5 + $0xa0] sm:$0xff]
    %v217 = vld [vmem:[#allocation5 + $0xa8] sm:$0xff]
    %v218 = vld [vmem:[#allocation5 + $0xb0] sm:$0xff]
    %v219 = vld [vmem:[#allocation5 + $0xb8] sm:$0xff]
    %v220 = vld [vmem:[#allocation5 + $0xc0] sm:$0xff]
    %v221 = vld [vmem:[#allocation5 + $0xc8] sm:$0xff]
    %v222 = vld [vmem:[#allocation5 + $0xd0] sm:$0xff]
    %v223 = vld [vmem:[#allocation5 + $0xd8] sm:$0xff]
    %v224 = vld [vmem:[#allocation5 + $0xe0] sm:$0xff]
    %v225 = vld [vmem:[#allocation5 + $0xe8] sm:$0xff]
    %v226 = vld [vmem:[#allocation5 + $0xf0] sm:$0xff]
    %v227 = vld [vmem:[#allocation5 + $0xf8] sm:$0xff]
    %v228 = vld [vmem:[#allocation5 + $0x100] sm:$0xff]
    %v229 = vld [vmem:[#allocation5 + $0x108] sm:$0xff]
    %v230 = vld [vmem:[#allocation5 + $0x110] sm:$0xff]
    %v231 = vld [vmem:[#allocation5 + $0x118] sm:$0xff]
    %v232 = vld [vmem:[#allocation5 + $0x120] sm:$0xff]
    %v233 = vld [vmem:[#allocation5 + $0x128] sm:$0xff]
    %v234 = vld [vmem:[#allocation5 + $0x130] sm:$0xff]
    %v235 = vld [vmem:[#allocation5 + $0x138] sm:$0xff]
    %v236 = vld [vmem:[#allocation5 + $0x140] sm:$0xff]
    %v237 = vld [vmem:[#allocation5 + $0x148] sm:$0xff]
    %v238 = vld [vmem:[#allocation5 + $0x150] sm:$0xff]
    %v239 = vld [vmem:[#allocation5 + $0x158] sm:$0xff]
    %v240 = vld [vmem:[#allocation5 + $0x160] sm:$0xff]
    %v241 = vld [vmem:[#allocation5 + $0x168] sm:$0xff]
    %v242 = vld [vmem:[#allocation5 + $0x170] sm:$0xff]
    %v243 = vld [vmem:[#allocation5 + $0x178] sm:$0xff]
    %v244 = vld [vmem:[#allocation5 + $0x180] sm:$0xff]
    %v245 = vld [vmem:[#allocation5 + $0x188] sm:$0xff]
    %v246 = vld [vmem:[#allocation5 + $0x190] sm:$0xff]
    %v247 = vld [vmem:[#allocation5 + $0x198] sm:$0xff]
    %v248 = vld [vmem:[#allocation5 + $0x1a0] sm:$0xff]
    %v249 = vld [vmem:[#allocation5 + $0x1a8] sm:$0xff]
    %v250 = vld [vmem:[#allocation5 + $0x1b0] sm:$0xff]
    %v251 = vld [vmem:[#allocation5 + $0x1b8] sm:$0xff]
    %v252 = vld [vmem:[#allocation5 + $0x1c0] sm:$0xff]
    %v253 = vld [vmem:[#allocation5 + $0x1c8] sm:$0xff]
    %v254 = vld [vmem:[#allocation5 + $0x1d0] sm:$0xff]
    %v255 = vld [vmem:[#allocation5 + $0x1d8] sm:$0xff]
    %v256 = vld [vmem:[#allocation5 + $0x1e0] sm:$0xff]
    %v257 = vld [vmem:[#allocation5 + $0x1e8] sm:$0xff]
    %v258 = vld [vmem:[#allocation5 + $0x1f0] sm:$0xff]
    %v259 = vld [vmem:[#allocation5 + $0x1f8] sm:$0xff]
    %v260 = vld [vmem:[#allocation5 + $0x200] sm:$0xff]
    %v261 = vld [vmem:[#allocation5 + $0x208] sm:$0xff]
    %v262 = vld [vmem:[#allocation5 + $0x210] sm:$0xff]
    %v263 = vld [vmem:[#allocation5 + $0x218] sm:$0xff]
    %v264 = vld [vmem:[#allocation5 + $0x220] sm:$0xff]
    %v265 = vld [vmem:[#allocation5 + $0x228] sm:$0xff]
    %v266 = vld [vmem:[#allocation5 + $0x230] sm:$0xff]
    %v267 = vld [vmem:[#allocation5 + $0x238] sm:$0xff]
    %v268 = vld [vmem:[#allocation5 + $0x240] sm:$0xff]
    %v269 = vld [vmem:[#allocation5 + $0x248] sm:$0xff]
    %v270 = vld [vmem:[#allocation5 + $0x250] sm:$0xff]
    %v271 = vld [vmem:[#allocation5 + $0x258] sm:$0xff]
    %v272 = vld [vmem:[#allocation5 + $0x260] sm:$0xff]
    %v273 = vld [vmem:[#allocation5 + $0x268] sm:$0xff]
    %v274 = vld [vmem:[#allocation5 + $0x270] sm:$0xff]
    %v275 = vld [vmem:[#allocation5 + $0x278] sm:$0xff]
    %v276 = vld [vmem:[#allocation5 + $0x280] sm:$0xff]
    %v277 = vld [vmem:[#allocation5 + $0x288] sm:$0xff]
    %v278 = vld [vmem:[#allocation5 + $0x290] sm:$0xff]
    %v279 = vld [vmem:[#allocation5 + $0x298] sm:$0xff]
    %v280 = vld [vmem:[#allocation5 + $0x2a0] sm:$0xff]
    %v281 = vld [vmem:[#allocation5 + $0x2a8] sm:$0xff]
    %v282 = vld [vmem:[#allocation5 + $0x2b0] sm:$0xff]
    %v283 = vld [vmem:[#allocation5 + $0x2b8] sm:$0xff]
    %v284 = vld [vmem:[#allocation5 + $0x2c0] sm:$0xff]
    %v285 = vld [vmem:[#allocation5 + $0x2c8] sm:$0xff]
    %v286 = vld [vmem:[#allocation5 + $0x2d0] sm:$0xff]
    %v287 = vld [vmem:[#allocation5 + $0x2d8] sm:$0xff]
    %v288 = vld [vmem:[#allocation5 + $0x2e0] sm:$0xff]
    %v289 = vld [vmem:[#allocation5 + $0x2e8] sm:$0xff]
    %v290 = vld [vmem:[#allocation5 + $0x2f0] sm:$0xff]
    %v291 = vld [vmem:[#allocation5 + $0x2f8] sm:$0xff]
    %v292 = vld [vmem:[#allocation5 + $0x300] sm:$0xff]
    %v293 = vld [vmem:[#allocation5 + $0x308] sm:$0xff]
    %v294 = vld [vmem:[#allocation5 + $0x310] sm:$0xff]
    %v295 = vld [vmem:[#allocation5 + $0x318] sm:$0xff]
    %v296 = vld [vmem:[#allocation5 + $0x320] sm:$0xff]
    %v297 = vld [vmem:[#allocation5 + $0x328] sm:$0xff]
    %v298 = vld [vmem:[#allocation5 + $0x330] sm:$0xff]
    %v299 = vld [vmem:[#allocation5 + $0x338] sm:$0xff]
    %v300 = vld [vmem:[#allocation5 + $0x340] sm:$0xff]
    %v301 = vld [vmem:[#allocation5 + $0x348] sm:$0xff]
    %v302 = vld [vmem:[#allocation5 + $0x350] sm:$0xff]
    %v303 = vld [vmem:[#allocation5 + $0x358] sm:$0xff]
    %v304 = vld [vmem:[#allocation5 + $0x360] sm:$0xff]
    %v305 = vld [vmem:[#allocation5 + $0x368] sm:$0xff]
    %v306 = vld [vmem:[#allocation5 + $0x370] sm:$0xff]
    %v307 = vld [vmem:[#allocation5 + $0x378] sm:$0xff]
    %v308 = vld [vmem:[#allocation5 + $0x380] sm:$0xff]
    %v309 = vld [vmem:[#allocation5 + $0x388] sm:$0xff]
    %v310 = vld [vmem:[#allocation5 + $0x390] sm:$0xff]
    %v311 = vld [vmem:[#allocation5 + $0x398] sm:$0xff]
    %v312 = vld [vmem:[#allocation5 + $0x3a0] sm:$0xff]
    %v313 = vld [vmem:[#allocation5 + $0x3a8] sm:$0xff]
    %v314 = vld [vmem:[#allocation5 + $0x3b0] sm:$0xff]
    %v315 = vld [vmem:[#allocation5 + $0x3b8] sm:$0xff]
    %v316 = vld [vmem:[#allocation5 + $0x3c0] sm:$0xff]
    %v317 = vld [vmem:[#allocation5 + $0x3c8] sm:$0xff]
    %v318 = vld [vmem:[#allocation5 + $0x3d0] sm:$0xff]
    %v319 = vld [vmem:[#allocation5 + $0x3d8] sm:$0xff]
    %v320 = vld [vmem:[#allocation5 + $0x3e0] sm:$0xff]
    %v321 = vld [vmem:[#allocation5 + $0x3e8] sm:$0xff]
    %v322 = vld [vmem:[#allocation5 + $0x3f0] sm:$0xff]
    %v323 = vld [vmem:[#allocation5 + $0x3f8] sm:$0xff]
    %v324 = vld [vmem:[#allocation5 + $0x400] sm:$0xff]
    %v325 = vld [vmem:[#allocation5 + $0x408] sm:$0xff]
    %v326 = vld [vmem:[#allocation5 + $0x410] sm:$0xff]
    %v327 = vld [vmem:[#allocation5 + $0x418] sm:$0xff]
    %v328 = vld [vmem:[#allocation5 + $0x420] sm:$0xff]
    %v329 = vld [vmem:[#allocation5 + $0x428] sm:$0xff]
    %v330 = vld [vmem:[#allocation5 + $0x430] sm:$0xff]
    %v331 = vld [vmem:[#allocation5 + $0x438] sm:$0xff]
    %v332 = vld [vmem:[#allocation5 + $0x440] sm:$0xff]
    %v333 = vld [vmem:[#allocation5 + $0x448] sm:$0xff]
    %v334 = vld [vmem:[#allocation5 + $0x450] sm:$0xff]
    %v335 = vld [vmem:[#allocation5 + $0x458] sm:$0xff]
    %v336 = vld [vmem:[#allocation5 + $0x460] sm:$0xff]
    %v337 = vld [vmem:[#allocation5 + $0x468] sm:$0xff]
    %v338 = vld [vmem:[#allocation5 + $0x470] sm:$0xff]
    %v339 = vld [vmem:[#allocation5 + $0x478] sm:$0xff]
    %v340 = vld [vmem:[#allocation5 + $0x480] sm:$0xff]
    %v341 = vld [vmem:[#allocation5 + $0x488] sm:$0xff]
    %v342 = vld [vmem:[#allocation5 + $0x490] sm:$0xff]
    %v343 = vld [vmem:[#allocation5 + $0x498] sm:$0xff]
    %v344 = vld [vmem:[#allocation5 + $0x4a0] sm:$0xff]
    %v345 = vld [vmem:[#allocation5 + $0x4a8] sm:$0xff]
    %v346 = vld [vmem:[#allocation5 + $0x4b0] sm:$0xff]
    %v347 = vld [vmem:[#allocation5 + $0x4b8] sm:$0xff]
    %v348 = vld [vmem:[#allocation5 + $0x4c0] sm:$0xff]
    %v349 = vld [vmem:[#allocation5 + $0x4c8] sm:$0xff]
    %v350 = vld [vmem:[#allocation5 + $0x4d0] sm:$0xff]
    %v351 = vld [vmem:[#allocation5 + $0x4d8] sm:$0xff]
    %v352 = vld [vmem:[#allocation5 + $0x4e0] sm:$0xff]
    %v353 = vld [vmem:[#allocation5 + $0x4e8] sm:$0xff]
    %v354 = vld [vmem:[#allocation5 + $0x4f0] sm:$0xff]
    %v355 = vld [vmem:[#allocation5 + $0x4f8] sm:$0xff]
    %v356 = vld [vmem:[#allocation5 + $0x500] sm:$0xff]
    %v357 = vld [vmem:[#allocation5 + $0x508] sm:$0xff]
    %v358 = vld [vmem:[#allocation5 + $0x510] sm:$0xff]
    %v359 = vld [vmem:[#allocation5 + $0x518] sm:$0xff]
    %v360 = vld [vmem:[#allocation5 + $0x520] sm:$0xff]
    %v361 = vld [vmem:[#allocation5 + $0x528] sm:$0xff]
    %v362 = vld [vmem:[#allocation5 + $0x530] sm:$0xff]
    %v363 = vld [vmem:[#allocation5 + $0x538] sm:$0xff]
    %v364 = vld [vmem:[#allocation5 + $0x540] sm:$0xff]
    %v365 = vld [vmem:[#allocation5 + $0x548] sm:$0xff]
    %v366 = vld [vmem:[#allocation5 + $0x550] sm:$0xff]
    %v367 = vld [vmem:[#allocation5 + $0x558] sm:$0xff]
    %v368 = vld [vmem:[#allocation5 + $0x560] sm:$0xff]
    %v369 = vld [vmem:[#allocation5 + $0x568] sm:$0xff]
    %v370 = vld [vmem:[#allocation5 + $0x570] sm:$0xff]
    %v371 = vld [vmem:[#allocation5 + $0x578] sm:$0xff]
    %v372 = vld [vmem:[#allocation5 + $0x580] sm:$0xff]
    %v373 = vld [vmem:[#allocation5 + $0x588] sm:$0xff]
    %v374 = vld [vmem:[#allocation5 + $0x590] sm:$0xff]
    %v375 = vld [vmem:[#allocation5 + $0x598] sm:$0xff]
    %v376 = vld [vmem:[#allocation5 + $0x5a0] sm:$0xff]
    %v377 = vld [vmem:[#allocation5 + $0x5a8] sm:$0xff]
    %v378 = vld [vmem:[#allocation5 + $0x5b0] sm:$0xff]
    %v379 = vld [vmem:[#allocation5 + $0x5b8] sm:$0xff]
    %v380 = vld [vmem:[#allocation5 + $0x5c0] sm:$0xff]
    %v381 = vld [vmem:[#allocation5 + $0x5c8] sm:$0xff]
    %v382 = vld [vmem:[#allocation5 + $0x5d0] sm:$0xff]
    %v383 = vld [vmem:[#allocation5 + $0x5d8] sm:$0xff]
    %v384 = vld [vmem:[#allocation5 + $0x5e0] sm:$0xff]
    %v385 = vld [vmem:[#allocation5 + $0x5e8] sm:$0xff]
    %v386 = vld [vmem:[#allocation5 + $0x5f0] sm:$0xff]
    %v387 = vld [vmem:[#allocation5 + $0x5f8] sm:$0xff]
    %v388 = vld [vmem:[#allocation5 + $0x600] sm:$0xff]
    %v389 = vld [vmem:[#allocation5 + $0x608] sm:$0xff]
    %v390 = vld [vmem:[#allocation5 + $0x610] sm:$0xff]
    %v391 = vld [vmem:[#allocation5 + $0x618] sm:$0xff]
    %v392 = vld [vmem:[#allocation5 + $0x620] sm:$0xff]
    %v393 = vld [vmem:[#allocation5 + $0x628] sm:$0xff]
    %v394 = vld [vmem:[#allocation5 + $0x630] sm:$0xff]
    %v395 = vld [vmem:[#allocation5 + $0x638] sm:$0xff]
    %v396 = vld [vmem:[#allocation5 + $0x640] sm:$0xff]
    %v397 = vld [vmem:[#allocation5 + $0x648] sm:$0xff]
    %v398 = vld [vmem:[#allocation5 + $0x650] sm:$0xff]
    %v399 = vld [vmem:[#allocation5 + $0x658] sm:$0xff]
    %v400 = vld [vmem:[#allocation5 + $0x660] sm:$0xff]
    %v401 = vld [vmem:[#allocation5 + $0x668] sm:$0xff]
    %v402 = vld [vmem:[#allocation5 + $0x670] sm:$0xff]
    %v403 = vld [vmem:[#allocation5 + $0x678] sm:$0xff]
    %v404 = vld [vmem:[#allocation5 + $0x680] sm:$0xff]
    %v405 = vld [vmem:[#allocation5 + $0x688] sm:$0xff]
    %v406 = vld [vmem:[#allocation5 + $0x690] sm:$0xff]
    %v407 = vld [vmem:[#allocation5 + $0x698] sm:$0xff]
    %v408 = vld [vmem:[#allocation5 + $0x6a0] sm:$0xff]
    %v409 = vld [vmem:[#allocation5 + $0x6a8] sm:$0xff]
    %v410 = vld [vmem:[#allocation5 + $0x6b0] sm:$0xff]
    %v411 = vld [vmem:[#allocation5 + $0x6b8] sm:$0xff]
    %v412 = vld [vmem:[#allocation5 + $0x6c0] sm:$0xff]
    %v413 = vld [vmem:[#allocation5 + $0x6c8] sm:$0xff]
    %v414 = vld [vmem:[#allocation5 + $0x6d0] sm:$0xff]
    %v415 = vld [vmem:[#allocation5 + $0x6d8] sm:$0xff]
    %v416 = vld [vmem:[#allocation5 + $0x6e0] sm:$0xff]
    %v417 = vld [vmem:[#allocation5 + $0x6e8] sm:$0xff]
    %v418 = vld [vmem:[#allocation5 + $0x6f0] sm:$0xff]
    %v419 = vld [vmem:[#allocation5 + $0x6f8] sm:$0xff]
    %v420 = vld [vmem:[#allocation5 + $0x700] sm:$0xff]
    %v421 = vld [vmem:[#allocation5 + $0x708] sm:$0xff]
    %v422 = vld [vmem:[#allocation5 + $0x710] sm:$0xff]
    %v423 = vld [vmem:[#allocation5 + $0x718] sm:$0xff]
    %v424 = vld [vmem:[#allocation5 + $0x720] sm:$0xff]
    %v425 = vld [vmem:[#allocation5 + $0x728] sm:$0xff]
    %v426 = vld [vmem:[#allocation5 + $0x730] sm:$0xff]
    %v427 = vld [vmem:[#allocation5 + $0x738] sm:$0xff]
    %v428 = vld [vmem:[#allocation5 + $0x740] sm:$0xff]
    %v429 = vld [vmem:[#allocation5 + $0x748] sm:$0xff]
    %v430 = vld [vmem:[#allocation5 + $0x750] sm:$0xff]
    %v431 = vld [vmem:[#allocation5 + $0x758] sm:$0xff]
    %v432 = vld [vmem:[#allocation5 + $0x760] sm:$0xff]
    %v433 = vld [vmem:[#allocation5 + $0x768] sm:$0xff]
    %v434 = vld [vmem:[#allocation5 + $0x770] sm:$0xff]
    %v435 = vld [vmem:[#allocation5 + $0x778] sm:$0xff]
    %v436 = vld [vmem:[#allocation5 + $0x780] sm:$0xff]
    %v437 = vld [vmem:[#allocation5 + $0x788] sm:$0xff]
    %v438 = vld [vmem:[#allocation5 + $0x790] sm:$0xff]
    %v439 = vld [vmem:[#allocation5 + $0x798] sm:$0xff]
    %v440 = vld [vmem:[#allocation5 + $0x7a0] sm:$0xff]
    %v441 = vld [vmem:[#allocation5 + $0x7a8] sm:$0xff]
    %v442 = vld [vmem:[#allocation5 + $0x7b0] sm:$0xff]
    %v443 = vld [vmem:[#allocation5 + $0x7b8] sm:$0xff]
    %v444 = vld [vmem:[#allocation5 + $0x7c0] sm:$0xff]
    %v445 = vld [vmem:[#allocation5 + $0x7c8] sm:$0xff]
    %v446 = vld [vmem:[#allocation5 + $0x7d0] sm:$0xff]
    %v447 = vld [vmem:[#allocation5 + $0x7d8] sm:$0xff]
    %v448 = vld [vmem:[#allocation5 + $0x7e0] sm:$0xff]
    %v449 = vld [vmem:[#allocation5 + $0x7e8] sm:$0xff]
    %v450 = vld [vmem:[#allocation5 + $0x7f0] sm:$0xff]
    %v451 = vld [vmem:[#allocation5 + $0x7f8] sm:$0xff]
    %v452 = vld [vmem:[%s4] sm:$0xff]
    %v454 = vperm.slane %v452, 0
    %v455 = vperm.slane %v452, 1
    %v456 = vperm.slane %v452, 2
    %v457 = vperm.slane %v452, 3
    %v458 = vperm.slane %v452, 4
    %v459 = vperm.slane %v452, 5
    %v460 = vperm.slane %v452, 6
    %v461 = vperm.slane %v452, 7
    %470 = vmatpush.msra.mxu0 %v316
    %471 = vmatpush.msra.mxu0 %v308
    %472 = vmatpush.msra.mxu0 %v300
    %473 = vmatpush.msra.mxu0 %v292
    %474 = vmatpush.msra.mxu0 %v284
    %475 = vmatpush.msra.mxu0 %v276
    %476 = vmatpush.msra.mxu0 %v268
    %477 = vmatpush.msra.mxu0 %v260
    %478 = vmatpush.msra.mxu0 %v252
    %479 = vmatpush.msra.mxu0 %v244
    %480 = vmatpush.msra.mxu0 %v236
    %481 = vmatpush.msra.mxu0 %v228
    %482 = vmatpush.msra.mxu0 %v220
    %483 = vmatpush.msra.mxu0 %v212
    %484 = vmatpush.msra.mxu0 %v204
    %485 = vmatpush.msra.mxu0 %v196
    %486 = vmatmul.f32.gmra.mxu0 %v180
    %v487 = vpop.f32.mrf.mxu0
    %v488 = vadd.f32 %v454, %v487
    %489 = vdwg.mxu0
    %490 = vmatpush.msra.mxu0 %v444
    %491 = vmatpush.msra.mxu0 %v436
    %492 = vmatpush.msra.mxu0 %v428
    %493 = vmatpush.msra.mxu0 %v420
    %494 = vmatpush.msra.mxu0 %v412
    %495 = vmatpush.msra.mxu0 %v404
    %496 = vmatpush.msra.mxu0 %v396
    %497 = vmatpush.msra.mxu0 %v388
    %498 = vmatpush.msra.mxu0 %v380
    %499 = vmatpush.msra.mxu0 %v372
    %500 = vmatpush.msra.mxu0 %v364
    %501 = vmatpush.msra.mxu0 %v356
    %502 = vmatpush.msra.mxu0 %v348
    %503 = vmatpush.msra.mxu0 %v340
    %504 = vmatpush.msra.mxu0 %v332
    %505 = vmatpush.msra.mxu0 %v324
    %506 = vmatmul.f32.gmra.mxu0 %v195
    %v507 = vpop.f32.mrf.mxu0
    %v508 = vadd.f32 %v488, %v507
    %509 = vdwg.mxu0
    %510 = vmatpush.msra.mxu0 %v317
    %511 = vmatpush.msra.mxu0 %v309
    %512 = vmatpush.msra.mxu0 %v301
    %513 = vmatpush.msra.mxu0 %v293
    %514 = vmatpush.msra.mxu0 %v285
    %515 = vmatpush.msra.mxu0 %v277
    %516 = vmatpush.msra.mxu0 %v269
    %517 = vmatpush.msra.mxu0 %v261
    %518 = vmatpush.msra.mxu0 %v253
    %519 = vmatpush.msra.mxu0 %v245
    %520 = vmatpush.msra.mxu0 %v237
    %521 = vmatpush.msra.mxu0 %v229
    %522 = vmatpush.msra.mxu0 %v221
    %523 = vmatpush.msra.mxu0 %v213
    %524 = vmatpush.msra.mxu0 %v205
    %525 = vmatpush.msra.mxu0 %v197
    %526 = vmatmul.f32.gmra.mxu0 %v180
    %v527 = vpop.f32.mrf.mxu0
    %v528 = vadd.f32 %v455, %v527
    %529 = vdwg.mxu0
    %530 = vmatpush.msra.mxu0 %v445
    %531 = vmatpush.msra.mxu0 %v437
    %532 = vmatpush.msra.mxu0 %v429
    %533 = vmatpush.msra.mxu0 %v421
    %534 = vmatpush.msra.mxu0 %v413
    %535 = vmatpush.msra.mxu0 %v405
    %536 = vmatpush.msra.mxu0 %v397
    %537 = vmatpush.msra.mxu0 %v389
    %538 = vmatpush.msra.mxu0 %v381
    %539 = vmatpush.msra.mxu0 %v373
    %540 = vmatpush.msra.mxu0 %v365
    %541 = vmatpush.msra.mxu0 %v357
    %542 = vmatpush.msra.mxu0 %v349
    %543 = vmatpush.msra.mxu0 %v341
    %544 = vmatpush.msra.mxu0 %v333
    %545 = vmatpush.msra.mxu0 %v325
    %546 = vmatmul.f32.gmra.mxu0 %v195
    %v547 = vpop.f32.mrf.mxu0
    %v548 = vadd.f32 %v528, %v547
    %549 = vdwg.mxu0
    %550 = vmatpush.msra.mxu0 %v318
    %551 = vmatpush.msra.mxu0 %v310
    %552 = vmatpush.msra.mxu0 %v302
    %553 = vmatpush.msra.mxu0 %v294
    %554 = vmatpush.msra.mxu0 %v286
    %555 = vmatpush.msra.mxu0 %v278
    %556 = vmatpush.msra.mxu0 %v270
    %557 = vmatpush.msra.mxu0 %v262
    %558 = vmatpush.msra.mxu0 %v254
    %559 = vmatpush.msra.mxu0 %v246
    %560 = vmatpush.msra.mxu0 %v238
    %561 = vmatpush.msra.mxu0 %v230
    %562 = vmatpush.msra.mxu0 %v222
    %563 = vmatpush.msra.mxu0 %v214
    %564 = vmatpush.msra.mxu0 %v206
    %565 = vmatpush.msra.mxu0 %v198
    %566 = vmatmul.f32.gmra.mxu0 %v180
    %v567 = vpop.f32.mrf.mxu0
    %v568 = vadd.f32 %v456, %v567
    %569 = vdwg.mxu0
    %570 = vmatpush.msra.mxu0 %v446
    %571 = vmatpush.msra.mxu0 %v438
    %572 = vmatpush.msra.mxu0 %v430
    %573 = vmatpush.msra.mxu0 %v422
    %574 = vmatpush.msra.mxu0 %v414
    %575 = vmatpush.msra.mxu0 %v406
    %576 = vmatpush.msra.mxu0 %v398
    %577 = vmatpush.msra.mxu0 %v390
    %578 = vmatpush.msra.mxu0 %v382
    %579 = vmatpush.msra.mxu0 %v374
    %580 = vmatpush.msra.mxu0 %v366
    %581 = vmatpush.msra.mxu0 %v358
    %582 = vmatpush.msra.mxu0 %v350
    %583 = vmatpush.msra.mxu0 %v342
    %584 = vmatpush.msra.mxu0 %v334
    %585 = vmatpush.msra.mxu0 %v326
    %586 = vmatmul.f32.gmra.mxu0 %v195
    %v587 = vpop.f32.mrf.mxu0
    %v588 = vadd.f32 %v568, %v587
    %589 = vdwg.mxu0
    %590 = vmatpush.msra.mxu0 %v319
    %591 = vmatpush.msra.mxu0 %v311
    %592 = vmatpush.msra.mxu0 %v303
    %593 = vmatpush.msra.mxu0 %v295
    %594 = vmatpush.msra.mxu0 %v287
    %595 = vmatpush.msra.mxu0 %v279
    %596 = vmatpush.msra.mxu0 %v271
    %597 = vmatpush.msra.mxu0 %v263
    %598 = vmatpush.msra.mxu0 %v255
    %599 = vmatpush.msra.mxu0 %v247
    %600 = vmatpush.msra.mxu0 %v239
    %601 = vmatpush.msra.mxu0 %v231
    %602 = vmatpush.msra.mxu0 %v223
    %603 = vmatpush.msra.mxu0 %v215
    %604 = vmatpush.msra.mxu0 %v207
    %605 = vmatpush.msra.mxu0 %v199
    %606 = vmatmul.f32.gmra.mxu0 %v180
    %v607 = vpop.f32.mrf.mxu0
    %v608 = vadd.f32 %v457, %v607
    %609 = vdwg.mxu0
    %610 = vmatpush.msra.mxu0 %v447
    %611 = vmatpush.msra.mxu0 %v439
    %612 = vmatpush.msra.mxu0 %v431
    %613 = vmatpush.msra.mxu0 %v423
    %614 = vmatpush.msra.mxu0 %v415
    %615 = vmatpush.msra.mxu0 %v407
    %616 = vmatpush.msra.mxu0 %v399
    %617 = vmatpush.msra.mxu0 %v391
    %618 = vmatpush.msra.mxu0 %v383
    %619 = vmatpush.msra.mxu0 %v375
    %620 = vmatpush.msra.mxu0 %v367
    %621 = vmatpush.msra.mxu0 %v359
    %622 = vmatpush.msra.mxu0 %v351
    %623 = vmatpush.msra.mxu0 %v343
    %624 = vmatpush.msra.mxu0 %v335
    %625 = vmatpush.msra.mxu0 %v327
    %626 = vmatmul.f32.gmra.mxu0 %v195
    %v627 = vpop.f32.mrf.mxu0
    %v628 = vadd.f32 %v608, %v627
    %629 = vdwg.mxu0
    %630 = vmatpush.msra.mxu0 %v320
    %631 = vmatpush.msra.mxu0 %v312
    %632 = vmatpush.msra.mxu0 %v304
    %633 = vmatpush.msra.mxu0 %v296
    %634 = vmatpush.msra.mxu0 %v288
    %635 = vmatpush.msra.mxu0 %v280
    %636 = vmatpush.msra.mxu0 %v272
    %637 = vmatpush.msra.mxu0 %v264
    %638 = vmatpush.msra.mxu0 %v256
    %639 = vmatpush.msra.mxu0 %v248
    %640 = vmatpush.msra.mxu0 %v240
    %641 = vmatpush.msra.mxu0 %v232
    %642 = vmatpush.msra.mxu0 %v224
    %643 = vmatpush.msra.mxu0 %v216
    %644 = vmatpush.msra.mxu0 %v208
    %645 = vmatpush.msra.mxu0 %v200
    %646 = vmatmul.f32.gmra.mxu0 %v180
    %v647 = vpop.f32.mrf.mxu0
    %v648 = vadd.f32 %v458, %v647
    %649 = vdwg.mxu0
    %650 = vmatpush.msra.mxu0 %v448
    %651 = vmatpush.msra.mxu0 %v440
    %652 = vmatpush.msra.mxu0 %v432
    %653 = vmatpush.msra.mxu0 %v424
    %654 = vmatpush.msra.mxu0 %v416
    %655 = vmatpush.msra.mxu0 %v408
    %656 = vmatpush.msra.mxu0 %v400
    %657 = vmatpush.msra.mxu0 %v392
    %658 = vmatpush.msra.mxu0 %v384
    %659 = vmatpush.msra.mxu0 %v376
    %660 = vmatpush.msra.mxu0 %v368
    %661 = vmatpush.msra.mxu0 %v360
    %662 = vmatpush.msra.mxu0 %v352
    %663 = vmatpush.msra.mxu0 %v344
    %664 = vmatpush.msra.mxu0 %v336
    %665 = vmatpush.msra.mxu0 %v328
    %666 = vmatmul.f32.gmra.mxu0 %v195
    %v667 = vpop.f32.mrf.mxu0
    %v668 = vadd.f32 %v648, %v667
    %669 = vdwg.mxu0
    %670 = vmatpush.msra.mxu0 %v321
    %671 = vmatpush.msra.mxu0 %v313
    %672 = vmatpush.msra.mxu0 %v305
    %673 = vmatpush.msra.mxu0 %v297
    %674 = vmatpush.msra.mxu0 %v289
    %675 = vmatpush.msra.mxu0 %v281
    %676 = vmatpush.msra.mxu0 %v273
    %677 = vmatpush.msra.mxu0 %v265
    %678 = vmatpush.msra.mxu0 %v257
    %679 = vmatpush.msra.mxu0 %v249
    %680 = vmatpush.msra.mxu0 %v241
    %681 = vmatpush.msra.mxu0 %v233
    %682 = vmatpush.msra.mxu0 %v225
    %683 = vmatpush.msra.mxu0 %v217
    %684 = vmatpush.msra.mxu0 %v209
    %685 = vmatpush.msra.mxu0 %v201
    %686 = vmatmul.f32.gmra.mxu0 %v180
    %v687 = vpop.f32.mrf.mxu0
    %v688 = vadd.f32 %v459, %v687
    %689 = vdwg.mxu0
    %690 = vmatpush.msra.mxu0 %v449
    %691 = vmatpush.msra.mxu0 %v441
    %692 = vmatpush.msra.mxu0 %v433
    %693 = vmatpush.msra.mxu0 %v425
    %694 = vmatpush.msra.mxu0 %v417
    %695 = vmatpush.msra.mxu0 %v409
    %696 = vmatpush.msra.mxu0 %v401
    %697 = vmatpush.msra.mxu0 %v393
    %698 = vmatpush.msra.mxu0 %v385
    %699 = vmatpush.msra.mxu0 %v377
    %700 = vmatpush.msra.mxu0 %v369
    %701 = vmatpush.msra.mxu0 %v361
    %702 = vmatpush.msra.mxu0 %v353
    %703 = vmatpush.msra.mxu0 %v345
    %704 = vmatpush.msra.mxu0 %v337
    %705 = vmatpush.msra.mxu0 %v329
    %706 = vmatmul.f32.gmra.mxu0 %v195
    %v707 = vpop.f32.mrf.mxu0
    %v708 = vadd.f32 %v688, %v707
    %709 = vdwg.mxu0
    %710 = vmatpush.msra.mxu0 %v322
    %711 = vmatpush.msra.mxu0 %v314
    %712 = vmatpush.msra.mxu0 %v306
    %713 = vmatpush.msra.mxu0 %v298
    %714 = vmatpush.msra.mxu0 %v290
    %715 = vmatpush.msra.mxu0 %v282
    %716 = vmatpush.msra.mxu0 %v274
    %717 = vmatpush.msra.mxu0 %v266
    %718 = vmatpush.msra.mxu0 %v258
    %719 = vmatpush.msra.mxu0 %v250
    %720 = vmatpush.msra.mxu0 %v242
    %721 = vmatpush.msra.mxu0 %v234
    %722 = vmatpush.msra.mxu0 %v226
    %723 = vmatpush.msra.mxu0 %v218
    %724 = vmatpush.msra.mxu0 %v210
    %725 = vmatpush.msra.mxu0 %v202
    %726 = vmatmul.f32.gmra.mxu0 %v180
    %v727 = vpop.f32.mrf.mxu0
    %v728 = vadd.f32 %v460, %v727
    %729 = vdwg.mxu0
    %730 = vmatpush.msra.mxu0 %v450
    %731 = vmatpush.msra.mxu0 %v442
    %732 = vmatpush.msra.mxu0 %v434
    %733 = vmatpush.msra.mxu0 %v426
    %734 = vmatpush.msra.mxu0 %v418
    %735 = vmatpush.msra.mxu0 %v410
    %736 = vmatpush.msra.mxu0 %v402
    %737 = vmatpush.msra.mxu0 %v394
    %738 = vmatpush.msra.mxu0 %v386
    %739 = vmatpush.msra.mxu0 %v378
    %740 = vmatpush.msra.mxu0 %v370
    %741 = vmatpush.msra.mxu0 %v362
    %742 = vmatpush.msra.mxu0 %v354
    %743 = vmatpush.msra.mxu0 %v346
    %744 = vmatpush.msra.mxu0 %v338
    %745 = vmatpush.msra.mxu0 %v330
    %746 = vmatmul.f32.gmra.mxu0 %v195
    %v747 = vpop.f32.mrf.mxu0
    %v748 = vadd.f32 %v728, %v747
    %749 = vdwg.mxu0
    %750 = vmatpush.msra.mxu0 %v323
    %751 = vmatpush.msra.mxu0 %v315
    %752 = vmatpush.msra.mxu0 %v307
    %753 = vmatpush.msra.mxu0 %v299
    %754 = vmatpush.msra.mxu0 %v291
    %755 = vmatpush.msra.mxu0 %v283
    %756 = vmatpush.msra.mxu0 %v275
    %757 = vmatpush.msra.mxu0 %v267
    %758 = vmatpush.msra.mxu0 %v259
    %759 = vmatpush.msra.mxu0 %v251
    %760 = vmatpush.msra.mxu0 %v243
    %761 = vmatpush.msra.mxu0 %v235
    %762 = vmatpush.msra.mxu0 %v227
    %763 = vmatpush.msra.mxu0 %v219
    %764 = vmatpush.msra.mxu0 %v211
    %765 = vmatpush.msra.mxu0 %v203
    %766 = vmatmul.f32.gmra.mxu0 %v180
    %v767 = vpop.f32.mrf.mxu0
    %v768 = vadd.f32 %v461, %v767
    %769 = vdwg.mxu0
    %770 = vmatpush.msra.mxu0 %v451
    %771 = vmatpush.msra.mxu0 %v443
    %772 = vmatpush.msra.mxu0 %v435
    %773 = vmatpush.msra.mxu0 %v427
    %774 = vmatpush.msra.mxu0 %v419
    %775 = vmatpush.msra.mxu0 %v411
    %776 = vmatpush.msra.mxu0 %v403
    %777 = vmatpush.msra.mxu0 %v395
    %778 = vmatpush.msra.mxu0 %v387
    %779 = vmatpush.msra.mxu0 %v379
    %780 = vmatpush.msra.mxu0 %v371
    %781 = vmatpush.msra.mxu0 %v363
    %782 = vmatpush.msra.mxu0 %v355
    %783 = vmatpush.msra.mxu0 %v347
    %784 = vmatpush.msra.mxu0 %v339
    %785 = vmatpush.msra.mxu0 %v331
    %786 = vmatmul.f32.gmra.mxu0 %v195
    %v787 = vpop.f32.mrf.mxu0
    %v788 = vadd.f32 %v768, %v787
    %789 = vdwg.mxu0
    %v790 = vld [vmem:[#allocation8] sm:$0xff]
    %v791 = vld [vmem:[#allocation8 + $0x8] sm:$0xff]
    %v792 = vld [vmem:[#allocation8 + $0x10] sm:$0xff]
    %v793 = vld [vmem:[#allocation8 + $0x18] sm:$0xff]
    %v795 = vsel %vm114, 0.0, 0
    %797 = vmatpush.msra.mxu0 0.0
    %798 = vmatpush.msra.mxu0 0.0
    %799 = vmatpush.msra.mxu0 0.0
    %800 = vmatpush.msra.mxu0 0.0
    %801 = vmatpush.msra.mxu0 0.0
    %802 = vmatpush.msra.mxu0 0.0
    %803 = vmatpush.msra.mxu0 0.0
    %804 = vmatpush.msra.mxu0 0.0
    %805 = vmatpush.msra.mxu0 0.0
    %806 = vmatpush.msra.mxu0 0.0
    %807 = vmatpush.msra.mxu0 0.0
    %808 = vmatpush.msra.mxu0 0.0
    %809 = vmatpush.msra.mxu0 %v793
    %810 = vmatpush.msra.mxu0 %v792
    %811 = vmatpush.msra.mxu0 %v791
    %812 = vmatpush.msra.mxu0 %v790
    %813 = vmatmul.f32.gmra.mxu0 %v795
    %v814 = vpop.f32.mrf.mxu0
    %v815 = vadd.f32 0.0, %v814
    %816 = vdwg.mxu0
    %v817 = vadd.f32 %v508, %v815
    %v818 = vxor.u32 %v817, 2147483648
    %v819 = vmul.f32 %v818, 1.442695
    %v820 = vpow.pop %v819
    %v821 = vadd.f32 %v820, 1.0
    %v822 = vrcp.pop %v821
    %v823 = vmul.f32 %v821, %v822
    %v824 = vsub.f32 1.0, %v823
    %v825 = vmul.f32 %v822, %v824
    %v826 = vadd.f32 %v822, %v825
    %vm827 = vweird.f32 %v821
    %vm828 = vweird.f32 %v822
    %vm829 = vmor %vm827, %vm828
    %v830 = vsel %vm829, %v822, %v826
    %v831 = vand.u32 2147483647, %v821
    %vm832 = vcmp.eq.f32.partialorder %v831, 8.507059e+37
    %v833 = vand.u32 %v821, 2147483648
    %v834 = vor.u32 1.1754944e-38, %v833
    %v835 = vsel %vm832, %v834, %v830
    %v836 = vmul.f32 1.0, %v835
    %v837 = vtanh.pop %v817
    %v838 = vmul.f32 %v836, 0.0
    %840 = vrot.lane.b32.xlu0 %v837, 64
    %v841 = vpop.permute.xlu0 %840
    %v843 = vmul.f32 %v836, %v841
    %845 = vrot.lane.b32.xlu0 %v843, 32
    %v846 = vpop.permute.xlu0 %845
    %v848 = vadd.f32 %v838, %v846
    %v849 = vtanh.pop %v848
    %851 = vrot.lane.b32.xlu0 %v849, 64
    %v852 = vpop.permute.xlu0 %851
    %v854 = vmul.f32 %v836, %v852
    %856 = vrot.lane.b32.xlu0 %v854, 32
    %v857 = vpop.permute.xlu0 %856
    %v858 = vsel %vm114, %v857, 0
    %860 = vmatpush.msra.mxu0 0.0
    %861 = vmatpush.msra.mxu0 0.0
    %862 = vmatpush.msra.mxu0 0.0
    %863 = vmatpush.msra.mxu0 0.0
    %864 = vmatpush.msra.mxu0 0.0
    %865 = vmatpush.msra.mxu0 0.0
    %866 = vmatpush.msra.mxu0 0.0
    %867 = vmatpush.msra.mxu0 0.0
    %868 = vmatpush.msra.mxu0 0.0
    %869 = vmatpush.msra.mxu0 0.0
    %870 = vmatpush.msra.mxu0 0.0
    %871 = vmatpush.msra.mxu0 0.0
    %872 = vmatpush.msra.mxu0 %v793
    %873 = vmatpush.msra.mxu0 %v792
    %874 = vmatpush.msra.mxu0 %v791
    %875 = vmatpush.msra.mxu0 %v790
    %876 = vmatmul.f32.gmra.mxu0 %v858
    %v877 = vpop.f32.mrf.mxu0
    %v878 = vadd.f32 0.0, %v877
    %879 = vdwg.mxu0
    %v880 = vadd.f32 %v548, %v878
    %v881 = vxor.u32 %v880, 2147483648
    %v882 = vmul.f32 %v881, 1.442695
    %v883 = vpow.pop %v882
    %v884 = vadd.f32 %v883, 1.0
    %v885 = vrcp.pop %v884
    %v886 = vmul.f32 %v884, %v885
    %v887 = vsub.f32 1.0, %v886
    %v888 = vmul.f32 %v885, %v887
    %v889 = vadd.f32 %v885, %v888
    %vm890 = vweird.f32 %v884
    %vm891 = vweird.f32 %v885
    %vm892 = vmor %vm890, %vm891
    %v893 = vsel %vm892, %v885, %v889
    %v894 = vand.u32 2147483647, %v884
    %vm895 = vcmp.eq.f32.partialorder %v894, 8.507059e+37
    %v896 = vand.u32 %v884, 2147483648
    %v897 = vor.u32 1.1754944e-38, %v896
    %v898 = vsel %vm895, %v897, %v893
    %v899 = vmul.f32 1.0, %v898
    %v900 = vtanh.pop %v880
    %v901 = vmul.f32 %v899, %v848
    %903 = vrot.lane.b32.xlu0 %v900, 64
    %v904 = vpop.permute.xlu0 %903
    %v906 = vmul.f32 %v899, %v904
    %908 = vrot.lane.b32.xlu0 %v906, 32
    %v909 = vpop.permute.xlu0 %908
    %v911 = vadd.f32 %v901, %v909
    %v912 = vtanh.pop %v911
    %914 = vrot.lane.b32.xlu0 %v912, 64
    %v915 = vpop.permute.xlu0 %914
    %v917 = vmul.f32 %v899, %v915
    %s918 = scalar_lea.vmem [#allocation7], 32
    %v919 = vld [vmem:[%s918] sm:$0xff]
    %v920 = vld [vmem:[%s918 + $0x8] sm:$0xff]
    %v921 = vld [vmem:[%s918 + $0x10] sm:$0xff]
    %v922 = vld [vmem:[%s918 + $0x18] sm:$0xff]
    %s923 = scalar_lea.vmem %s7, 1
    %v924 = vld [vmem:[%s923] sm:$0x1]
    %v926 = vperm.slane %v924, 0
    %928 = vmatpush.msra.mxu0 0.0
    %929 = vmatpush.msra.mxu0 0.0
    %930 = vmatpush.msra.mxu0 0.0
    %931 = vmatpush.msra.mxu0 0.0
    %932 = vmatpush.msra.mxu0 0.0
    %933 = vmatpush.msra.mxu0 0.0
    %934 = vmatpush.msra.mxu0 0.0
    %935 = vmatpush.msra.mxu0 0.0
    %936 = vmatpush.msra.mxu0 0.0
    %937 = vmatpush.msra.mxu0 0.0
    %938 = vmatpush.msra.mxu0 0.0
    %939 = vmatpush.msra.mxu0 0.0
    %940 = vmatpush.msra.mxu0 %v922
    %941 = vmatpush.msra.mxu0 %v921
    %942 = vmatpush.msra.mxu0 %v920
    %943 = vmatpush.msra.mxu0 %v919
    %944 = vmatmul.f32.gmra.mxu0 %v858
    %v945 = vpop.f32.mrf.mxu0
    %v946 = vadd.f32 %v926, %v945
    %947 = vdwg.mxu0
    %s948 = scalar_lea.vmem [#allocation8], 32
    %v949 = vld [vmem:[%s948] sm:$0xff]
    %v950 = vld [vmem:[%s948 + $0x8] sm:$0xff]
    %v951 = vld [vmem:[%s948 + $0x10] sm:$0xff]
    %v952 = vld [vmem:[%s948 + $0x18] sm:$0xff]
    %953 = vmatpush.msra.mxu0 0.0
    %954 = vmatpush.msra.mxu0 0.0
    %955 = vmatpush.msra.mxu0 0.0
    %956 = vmatpush.msra.mxu0 0.0
    %957 = vmatpush.msra.mxu0 0.0
    %958 = vmatpush.msra.mxu0 0.0
    %959 = vmatpush.msra.mxu0 0.0
    %960 = vmatpush.msra.mxu0 0.0
    %961 = vmatpush.msra.mxu0 0.0
    %962 = vmatpush.msra.mxu0 0.0
    %963 = vmatpush.msra.mxu0 0.0
    %964 = vmatpush.msra.mxu0 0.0
    %965 = vmatpush.msra.mxu0 %v952
    %966 = vmatpush.msra.mxu0 %v951
    %967 = vmatpush.msra.mxu0 %v950
    %968 = vmatpush.msra.mxu0 %v949
    %969 = vmatmul.f32.gmra.mxu0 %v795
    %v970 = vpop.f32.mrf.mxu0
    %v971 = vadd.f32 0.0, %v970
    %972 = vdwg.mxu0
    %v973 = vadd.f32 %v946, %v971
    %v974 = vxor.u32 %v973, 2147483648
    %v975 = vmul.f32 %v974, 1.442695
    %v976 = vpow.pop %v975
    %v977 = vadd.f32 %v976, 1.0
    %v978 = vrcp.pop %v977
    %v979 = vmul.f32 %v977, %v978
    %v980 = vsub.f32 1.0, %v979
    %v981 = vmul.f32 %v978, %v980
    %v982 = vadd.f32 %v978, %v981
    %vm983 = vweird.f32 %v977
    %vm984 = vweird.f32 %v978
    %vm985 = vmor %vm983, %vm984
    %v986 = vsel %vm985, %v978, %v982
    %v987 = vand.u32 2147483647, %v977
    %vm988 = vcmp.eq.f32.partialorder %v987, 8.507059e+37
    %v989 = vand.u32 %v977, 2147483648
    %v990 = vor.u32 1.1754944e-38, %v989
    %v991 = vsel %vm988, %v990, %v986
    %v992 = vmul.f32 1.0, %v991
    %v993 = vtanh.pop %v973
    %v994 = vmul.f32 %v992, 0.0
    %996 = vrot.lane.b32.xlu0 %v993, 64
    %v997 = vpop.permute.xlu0 %996
    %v999 = vmul.f32 %v992, %v997
    %1001 = vrot.lane.b32.xlu0 %v999, 32
    %v1002 = vpop.permute.xlu0 %1001
    %v1004 = vadd.f32 %v994, %v1002
    %v1005 = vtanh.pop %v1004
    %1007 = vrot.lane.b32.xlu0 %v1005, 64
    %v1008 = vpop.permute.xlu0 %1007
    %v1010 = vmul.f32 %v992, %v1008
    %1012 = vrot.lane.b32.xlu0 %v917, 32
    %v1013 = vpop.permute.xlu0 %1012
    %v1014 = vsel %vm114, %v1013, 0
    %1016 = vmatpush.msra.mxu0 0.0
    %1017 = vmatpush.msra.mxu0 0.0
    %1018 = vmatpush.msra.mxu0 0.0
    %1019 = vmatpush.msra.mxu0 0.0
    %1020 = vmatpush.msra.mxu0 0.0
    %1021 = vmatpush.msra.mxu0 0.0
    %1022 = vmatpush.msra.mxu0 0.0
    %1023 = vmatpush.msra.mxu0 0.0
    %1024 = vmatpush.msra.mxu0 0.0
    %1025 = vmatpush.msra.mxu0 0.0
    %1026 = vmatpush.msra.mxu0 0.0
    %1027 = vmatpush.msra.mxu0 0.0
    %1028 = vmatpush.msra.mxu0 %v793
    %1029 = vmatpush.msra.mxu0 %v792
    %1030 = vmatpush.msra.mxu0 %v791
    %1031 = vmatpush.msra.mxu0 %v790
    %1032 = vmatmul.f32.gmra.mxu0 %v1014
    %v1033 = vpop.f32.mrf.mxu0
    %v1034 = vadd.f32 0.0, %v1033
    %1035 = vdwg.mxu0
    %v1036 = vadd.f32 %v588, %v1034
    %v1037 = vxor.u32 %v1036, 2147483648
    %v1038 = vmul.f32 %v1037, 1.442695
    %v1039 = vpow.pop %v1038
    %v1040 = vadd.f32 %v1039, 1.0
    %v1041 = vrcp.pop %v1040
    %v1042 = vmul.f32 %v1040, %v1041
    %v1043 = vsub.f32 1.0, %v1042
    %v1044 = vmul.f32 %v1041, %v1043
    %v1045 = vadd.f32 %v1041, %v1044
    %vm1046 = vweird.f32 %v1040
    %vm1047 = vweird.f32 %v1041
    %vm1048 = vmor %vm1046, %vm1047
    %v1049 = vsel %vm1048, %v1041, %v1045
    %v1050 = vand.u32 2147483647, %v1040
    %vm1051 = vcmp.eq.f32.partialorder %v1050, 8.507059e+37
    %v1052 = vand.u32 %v1040, 2147483648
    %v1053 = vor.u32 1.1754944e-38, %v1052
    %v1054 = vsel %vm1051, %v1053, %v1049
    %v1055 = vmul.f32 1.0, %v1054
    %v1056 = vtanh.pop %v1036
    %v1057 = vmul.f32 %v1055, %v911
    %1059 = vrot.lane.b32.xlu0 %v1056, 64
    %v1060 = vpop.permute.xlu0 %1059
    %v1062 = vmul.f32 %v1055, %v1060
    %1064 = vrot.lane.b32.xlu0 %v1062, 32
    %v1065 = vpop.permute.xlu0 %1064
    %v1067 = vadd.f32 %v1057, %v1065
    %v1068 = vtanh.pop %v1067
    %1070 = vrot.lane.b32.xlu0 %v1068, 64
    %v1071 = vpop.permute.xlu0 %1070
    %v1073 = vmul.f32 %v1055, %v1071
    %1074 = vmatpush.msra.mxu0 0.0
    %1075 = vmatpush.msra.mxu0 0.0
    %1076 = vmatpush.msra.mxu0 0.0
    %1077 = vmatpush.msra.mxu0 0.0
    %1078 = vmatpush.msra.mxu0 0.0
    %1079 = vmatpush.msra.mxu0 0.0
    %1080 = vmatpush.msra.mxu0 0.0
    %1081 = vmatpush.msra.mxu0 0.0
    %1082 = vmatpush.msra.mxu0 0.0
    %1083 = vmatpush.msra.mxu0 0.0
    %1084 = vmatpush.msra.mxu0 0.0
    %1085 = vmatpush.msra.mxu0 0.0
    %1086 = vmatpush.msra.mxu0 %v922
    %1087 = vmatpush.msra.mxu0 %v921
    %1088 = vmatpush.msra.mxu0 %v920
    %1089 = vmatpush.msra.mxu0 %v919
    %1090 = vmatmul.f32.gmra.mxu0 %v1014
    %v1091 = vpop.f32.mrf.mxu0
    %v1092 = vadd.f32 %v926, %v1091
    %1093 = vdwg.mxu0
    %1095 = vrot.lane.b32.xlu0 %v1010, 32
    %v1096 = vpop.permute.xlu0 %1095
    %v1097 = vsel %vm114, %v1096, 0
    %1099 = vmatpush.msra.mxu0 0.0
    %1100 = vmatpush.msra.mxu0 0.0
    %1101 = vmatpush.msra.mxu0 0.0
    %1102 = vmatpush.msra.mxu0 0.0
    %1103 = vmatpush.msra.mxu0 0.0
    %1104 = vmatpush.msra.mxu0 0.0
    %1105 = vmatpush.msra.mxu0 0.0
    %1106 = vmatpush.msra.mxu0 0.0
    %1107 = vmatpush.msra.mxu0 0.0
    %1108 = vmatpush.msra.mxu0 0.0
    %1109 = vmatpush.msra.mxu0 0.0
    %1110 = vmatpush.msra.mxu0 0.0
    %1111 = vmatpush.msra.mxu0 %v952
    %1112 = vmatpush.msra.mxu0 %v951
    %1113 = vmatpush.msra.mxu0 %v950
    %1114 = vmatpush.msra.mxu0 %v949
    %1115 = vmatmul.f32.gmra.mxu0 %v1097
    %v1116 = vpop.f32.mrf.mxu0
    %v1117 = vadd.f32 0.0, %v1116
    %1118 = vdwg.mxu0
    %v1119 = vadd.f32 %v1092, %v1117
    %v1120 = vxor.u32 %v1119, 2147483648
    %v1121 = vmul.f32 %v1120, 1.442695
    %v1122 = vpow.pop %v1121
    %v1123 = vadd.f32 %v1122, 1.0
    %v1124 = vrcp.pop %v1123
    %v1125 = vmul.f32 %v1123, %v1124
    %v1126 = vsub.f32 1.0, %v1125
    %v1127 = vmul.f32 %v1124, %v1126
    %v1128 = vadd.f32 %v1124, %v1127
    %vm1129 = vweird.f32 %v1123
    %vm1130 = vweird.f32 %v1124
    %vm1131 = vmor %vm1129, %vm1130
    %v1132 = vsel %vm1131, %v1124, %v1128
    %v1133 = vand.u32 2147483647, %v1123
    %vm1134 = vcmp.eq.f32.partialorder %v1133, 8.507059e+37
    %v1135 = vand.u32 %v1123, 2147483648
    %v1136 = vor.u32 1.1754944e-38, %v1135
    %v1137 = vsel %vm1134, %v1136, %v1132
    %v1138 = vmul.f32 1.0, %v1137
    %v1139 = vtanh.pop %v1119
    %v1140 = vmul.f32 %v1138, %v1004
    %1142 = vrot.lane.b32.xlu0 %v1139, 64
    %v1143 = vpop.permute.xlu0 %1142
    %v1145 = vmul.f32 %v1138, %v1143
    %1147 = vrot.lane.b32.xlu0 %v1145, 32
    %v1148 = vpop.permute.xlu0 %1147
    %v1150 = vadd.f32 %v1140, %v1148
    %v1151 = vtanh.pop %v1150
    %1153 = vrot.lane.b32.xlu0 %v1151, 64
    %v1154 = vpop.permute.xlu0 %1153
    %v1156 = vmul.f32 %v1138, %v1154
    %1158 = vrot.lane.b32.xlu0 %v1073, 32
    %v1159 = vpop.permute.xlu0 %1158
    %v1160 = vsel %vm114, %v1159, 0
    %1162 = vmatpush.msra.mxu0 0.0
    %1163 = vmatpush.msra.mxu0 0.0
    %1164 = vmatpush.msra.mxu0 0.0
    %1165 = vmatpush.msra.mxu0 0.0
    %1166 = vmatpush.msra.mxu0 0.0
    %1167 = vmatpush.msra.mxu0 0.0
    %1168 = vmatpush.msra.mxu0 0.0
    %1169 = vmatpush.msra.mxu0 0.0
    %1170 = vmatpush.msra.mxu0 0.0
    %1171 = vmatpush.msra.mxu0 0.0
    %1172 = vmatpush.msra.mxu0 0.0
    %1173 = vmatpush.msra.mxu0 0.0
    %1174 = vmatpush.msra.mxu0 %v793
    %1175 = vmatpush.msra.mxu0 %v792
    %1176 = vmatpush.msra.mxu0 %v791
    %1177 = vmatpush.msra.mxu0 %v790
    %1178 = vmatmul.f32.gmra.mxu0 %v1160
    %v1179 = vpop.f32.mrf.mxu0
    %v1180 = vadd.f32 0.0, %v1179
    %1181 = vdwg.mxu0
    %v1182 = vadd.f32 %v628, %v1180
    %v1183 = vxor.u32 %v1182, 2147483648
    %v1184 = vmul.f32 %v1183, 1.442695
    %v1185 = vpow.pop %v1184
    %v1186 = vadd.f32 %v1185, 1.0
    %v1187 = vrcp.pop %v1186
    %v1188 = vmul.f32 %v1186, %v1187
    %v1189 = vsub.f32 1.0, %v1188
    %v1190 = vmul.f32 %v1187, %v1189
    %v1191 = vadd.f32 %v1187, %v1190
    %vm1192 = vweird.f32 %v1186
    %vm1193 = vweird.f32 %v1187
    %vm1194 = vmor %vm1192, %vm1193
    %v1195 = vsel %vm1194, %v1187, %v1191
    %v1196 = vand.u32 2147483647, %v1186
    %vm1197 = vcmp.eq.f32.partialorder %v1196, 8.507059e+37
    %v1198 = vand.u32 %v1186, 2147483648
    %v1199 = vor.u32 1.1754944e-38, %v1198
    %v1200 = vsel %vm1197, %v1199, %v1195
    %v1201 = vmul.f32 1.0, %v1200
    %v1202 = vtanh.pop %v1182
    %v1203 = vmul.f32 %v1201, %v1067
    %1205 = vrot.lane.b32.xlu0 %v1202, 64
    %v1206 = vpop.permute.xlu0 %1205
    %v1208 = vmul.f32 %v1201, %v1206
    %1210 = vrot.lane.b32.xlu0 %v1208, 32
    %v1211 = vpop.permute.xlu0 %1210
    %v1213 = vadd.f32 %v1203, %v1211
    %v1214 = vtanh.pop %v1213
    %1216 = vrot.lane.b32.xlu0 %v1214, 64
    %v1217 = vpop.permute.xlu0 %1216
    %v1219 = vmul.f32 %v1201, %v1217
    %1220 = vmatpush.msra.mxu0 0.0
    %1221 = vmatpush.msra.mxu0 0.0
    %1222 = vmatpush.msra.mxu0 0.0
    %1223 = vmatpush.msra.mxu0 0.0
    %1224 = vmatpush.msra.mxu0 0.0
    %1225 = vmatpush.msra.mxu0 0.0
    %1226 = vmatpush.msra.mxu0 0.0
    %1227 = vmatpush.msra.mxu0 0.0
    %1228 = vmatpush.msra.mxu0 0.0
    %1229 = vmatpush.msra.mxu0 0.0
    %1230 = vmatpush.msra.mxu0 0.0
    %1231 = vmatpush.msra.mxu0 0.0
    %1232 = vmatpush.msra.mxu0 %v922
    %1233 = vmatpush.msra.mxu0 %v921
    %1234 = vmatpush.msra.mxu0 %v920
    %1235 = vmatpush.msra.mxu0 %v919
    %1236 = vmatmul.f32.gmra.mxu0 %v1160
    %v1237 = vpop.f32.mrf.mxu0
    %v1238 = vadd.f32 %v926, %v1237
    %1239 = vdwg.mxu0
    %1241 = vrot.lane.b32.xlu0 %v1156, 32
    %v1242 = vpop.permute.xlu0 %1241
    %v1243 = vsel %vm114, %v1242, 0
    %1245 = vmatpush.msra.mxu0 0.0
    %1246 = vmatpush.msra.mxu0 0.0
    %1247 = vmatpush.msra.mxu0 0.0
    %1248 = vmatpush.msra.mxu0 0.0
    %1249 = vmatpush.msra.mxu0 0.0
    %1250 = vmatpush.msra.mxu0 0.0
    %1251 = vmatpush.msra.mxu0 0.0
    %1252 = vmatpush.msra.mxu0 0.0
    %1253 = vmatpush.msra.mxu0 0.0
    %1254 = vmatpush.msra.mxu0 0.0
    %1255 = vmatpush.msra.mxu0 0.0
    %1256 = vmatpush.msra.mxu0 0.0
    %1257 = vmatpush.msra.mxu0 %v952
    %1258 = vmatpush.msra.mxu0 %v951
    %1259 = vmatpush.msra.mxu0 %v950
    %1260 = vmatpush.msra.mxu0 %v949
    %1261 = vmatmul.f32.gmra.mxu0 %v1243
    %v1262 = vpop.f32.mrf.mxu0
    %v1263 = vadd.f32 0.0, %v1262
    %1264 = vdwg.mxu0
    %v1265 = vadd.f32 %v1238, %v1263
    %v1266 = vxor.u32 %v1265, 2147483648
    %v1267 = vmul.f32 %v1266, 1.442695
    %v1268 = vpow.pop %v1267
    %v1269 = vadd.f32 %v1268, 1.0
    %v1270 = vrcp.pop %v1269
    %v1271 = vmul.f32 %v1269, %v1270
    %v1272 = vsub.f32 1.0, %v1271
    %v1273 = vmul.f32 %v1270, %v1272
    %v1274 = vadd.f32 %v1270, %v1273
    %vm1275 = vweird.f32 %v1269
    %vm1276 = vweird.f32 %v1270
    %vm1277 = vmor %vm1275, %vm1276
    %v1278 = vsel %vm1277, %v1270, %v1274
    %v1279 = vand.u32 2147483647, %v1269
    %vm1280 = vcmp.eq.f32.partialorder %v1279, 8.507059e+37
    %v1281 = vand.u32 %v1269, 2147483648
    %v1282 = vor.u32 1.1754944e-38, %v1281
    %v1283 = vsel %vm1280, %v1282, %v1278
    %v1284 = vmul.f32 1.0, %v1283
    %v1285 = vtanh.pop %v1265
    %v1286 = vmul.f32 %v1284, %v1150
    %1288 = vrot.lane.b32.xlu0 %v1285, 64
    %v1289 = vpop.permute.xlu0 %1288
    %v1291 = vmul.f32 %v1284, %v1289
    %1293 = vrot.lane.b32.xlu0 %v1291, 32
    %v1294 = vpop.permute.xlu0 %1293
    %v1296 = vadd.f32 %v1286, %v1294
    %v1297 = vtanh.pop %v1296
    %1299 = vrot.lane.b32.xlu0 %v1297, 64
    %v1300 = vpop.permute.xlu0 %1299
    %v1302 = vmul.f32 %v1284, %v1300
    %1304 = vrot.lane.b32.xlu0 %v1219, 32
    %v1305 = vpop.permute.xlu0 %1304
    %v1306 = vsel %vm114, %v1305, 0
    %1308 = vmatpush.msra.mxu0 0.0
    %1309 = vmatpush.msra.mxu0 0.0
    %1310 = vmatpush.msra.mxu0 0.0
    %1311 = vmatpush.msra.mxu0 0.0
    %1312 = vmatpush.msra.mxu0 0.0
    %1313 = vmatpush.msra.mxu0 0.0
    %1314 = vmatpush.msra.mxu0 0.0
    %1315 = vmatpush.msra.mxu0 0.0
    %1316 = vmatpush.msra.mxu0 0.0
    %1317 = vmatpush.msra.mxu0 0.0
    %1318 = vmatpush.msra.mxu0 0.0
    %1319 = vmatpush.msra.mxu0 0.0
    %1320 = vmatpush.msra.mxu0 %v793
    %1321 = vmatpush.msra.mxu0 %v792
    %1322 = vmatpush.msra.mxu0 %v791
    %1323 = vmatpush.msra.mxu0 %v790
    %1324 = vmatmul.f32.gmra.mxu0 %v1306
    %v1325 = vpop.f32.mrf.mxu0
    %v1326 = vadd.f32 0.0, %v1325
    %1327 = vdwg.mxu0
    %v1328 = vadd.f32 %v668, %v1326
    %v1329 = vxor.u32 %v1328, 2147483648
    %v1330 = vmul.f32 %v1329, 1.442695
    %v1331 = vpow.pop %v1330
    %v1332 = vadd.f32 %v1331, 1.0
    %v1333 = vrcp.pop %v1332
    %v1334 = vmul.f32 %v1332, %v1333
    %v1335 = vsub.f32 1.0, %v1334
    %v1336 = vmul.f32 %v1333, %v1335
    %v1337 = vadd.f32 %v1333, %v1336
    %vm1338 = vweird.f32 %v1332
    %vm1339 = vweird.f32 %v1333
    %vm1340 = vmor %vm1338, %vm1339
    %v1341 = vsel %vm1340, %v1333, %v1337
    %v1342 = vand.u32 2147483647, %v1332
    %vm1343 = vcmp.eq.f32.partialorder %v1342, 8.507059e+37
    %v1344 = vand.u32 %v1332, 2147483648
    %v1345 = vor.u32 1.1754944e-38, %v1344
    %v1346 = vsel %vm1343, %v1345, %v1341
    %v1347 = vmul.f32 1.0, %v1346
    %v1348 = vtanh.pop %v1328
    %v1349 = vmul.f32 %v1347, %v1213
    %1351 = vrot.lane.b32.xlu0 %v1348, 64
    %v1352 = vpop.permute.xlu0 %1351
    %v1354 = vmul.f32 %v1347, %v1352
    %1356 = vrot.lane.b32.xlu0 %v1354, 32
    %v1357 = vpop.permute.xlu0 %1356
    %v1359 = vadd.f32 %v1349, %v1357
    %v1360 = vtanh.pop %v1359
    %1362 = vrot.lane.b32.xlu0 %v1360, 64
    %v1363 = vpop.permute.xlu0 %1362
    %v1365 = vmul.f32 %v1347, %v1363
    %1366 = vmatpush.msra.mxu0 0.0
    %1367 = vmatpush.msra.mxu0 0.0
    %1368 = vmatpush.msra.mxu0 0.0
    %1369 = vmatpush.msra.mxu0 0.0
    %1370 = vmatpush.msra.mxu0 0.0
    %1371 = vmatpush.msra.mxu0 0.0
    %1372 = vmatpush.msra.mxu0 0.0
    %1373 = vmatpush.msra.mxu0 0.0
    %1374 = vmatpush.msra.mxu0 0.0
    %1375 = vmatpush.msra.mxu0 0.0
    %1376 = vmatpush.msra.mxu0 0.0
    %1377 = vmatpush.msra.mxu0 0.0
    %1378 = vmatpush.msra.mxu0 %v922
    %1379 = vmatpush.msra.mxu0 %v921
    %1380 = vmatpush.msra.mxu0 %v920
    %1381 = vmatpush.msra.mxu0 %v919
    %1382 = vmatmul.f32.gmra.mxu0 %v1306
    %v1383 = vpop.f32.mrf.mxu0
    %v1384 = vadd.f32 %v926, %v1383
    %1385 = vdwg.mxu0
    %1387 = vrot.lane.b32.xlu0 %v1302, 32
    %v1388 = vpop.permute.xlu0 %1387
    %v1389 = vsel %vm114, %v1388, 0
    %1391 = vmatpush.msra.mxu0 0.0
    %1392 = vmatpush.msra.mxu0 0.0
    %1393 = vmatpush.msra.mxu0 0.0
    %1394 = vmatpush.msra.mxu0 0.0
    %1395 = vmatpush.msra.mxu0 0.0
    %1396 = vmatpush.msra.mxu0 0.0
    %1397 = vmatpush.msra.mxu0 0.0
    %1398 = vmatpush.msra.mxu0 0.0
    %1399 = vmatpush.msra.mxu0 0.0
    %1400 = vmatpush.msra.mxu0 0.0
    %1401 = vmatpush.msra.mxu0 0.0
    %1402 = vmatpush.msra.mxu0 0.0
    %1403 = vmatpush.msra.mxu0 %v952
    %1404 = vmatpush.msra.mxu0 %v951
    %1405 = vmatpush.msra.mxu0 %v950
    %1406 = vmatpush.msra.mxu0 %v949
    %1407 = vmatmul.f32.gmra.mxu0 %v1389
    %v1408 = vpop.f32.mrf.mxu0
    %v1409 = vadd.f32 0.0, %v1408
    %1410 = vdwg.mxu0
    %v1411 = vadd.f32 %v1384, %v1409
    %v1412 = vxor.u32 %v1411, 2147483648
    %v1413 = vmul.f32 %v1412, 1.442695
    %v1414 = vpow.pop %v1413
    %v1415 = vadd.f32 %v1414, 1.0
    %v1416 = vrcp.pop %v1415
    %v1417 = vmul.f32 %v1415, %v1416
    %v1418 = vsub.f32 1.0, %v1417
    %v1419 = vmul.f32 %v1416, %v1418
    %v1420 = vadd.f32 %v1416, %v1419
    %vm1421 = vweird.f32 %v1415
    %vm1422 = vweird.f32 %v1416
    %vm1423 = vmor %vm1421, %vm1422
    %v1424 = vsel %vm1423, %v1416, %v1420
    %v1425 = vand.u32 2147483647, %v1415
    %vm1426 = vcmp.eq.f32.partialorder %v1425, 8.507059e+37
    %v1427 = vand.u32 %v1415, 2147483648
    %v1428 = vor.u32 1.1754944e-38, %v1427
    %v1429 = vsel %vm1426, %v1428, %v1424
    %v1430 = vmul.f32 1.0, %v1429
    %v1431 = vtanh.pop %v1411
    %v1432 = vmul.f32 %v1430, %v1296
    %1434 = vrot.lane.b32.xlu0 %v1431, 64
    %v1435 = vpop.permute.xlu0 %1434
    %v1437 = vmul.f32 %v1430, %v1435
    %1439 = vrot.lane.b32.xlu0 %v1437, 32
    %v1440 = vpop.permute.xlu0 %1439
    %v1442 = vadd.f32 %v1432, %v1440
    %v1443 = vtanh.pop %v1442
    %1445 = vrot.lane.b32.xlu0 %v1443, 64
    %v1446 = vpop.permute.xlu0 %1445
    %v1448 = vmul.f32 %v1430, %v1446
    %1450 = vrot.lane.b32.xlu0 %v1365, 32
    %v1451 = vpop.permute.xlu0 %1450
    %v1452 = vsel %vm114, %v1451, 0
    %1454 = vmatpush.msra.mxu0 0.0
    %1455 = vmatpush.msra.mxu0 0.0
    %1456 = vmatpush.msra.mxu0 0.0
    %1457 = vmatpush.msra.mxu0 0.0
    %1458 = vmatpush.msra.mxu0 0.0
    %1459 = vmatpush.msra.mxu0 0.0
    %1460 = vmatpush.msra.mxu0 0.0
    %1461 = vmatpush.msra.mxu0 0.0
    %1462 = vmatpush.msra.mxu0 0.0
    %1463 = vmatpush.msra.mxu0 0.0
    %1464 = vmatpush.msra.mxu0 0.0
    %1465 = vmatpush.msra.mxu0 0.0
    %1466 = vmatpush.msra.mxu0 %v793
    %1467 = vmatpush.msra.mxu0 %v792
    %1468 = vmatpush.msra.mxu0 %v791
    %1469 = vmatpush.msra.mxu0 %v790
    %1470 = vmatmul.f32.gmra.mxu0 %v1452
    %v1471 = vpop.f32.mrf.mxu0
    %v1472 = vadd.f32 0.0, %v1471
    %1473 = vdwg.mxu0
    %v1474 = vadd.f32 %v708, %v1472
    %v1475 = vxor.u32 %v1474, 2147483648
    %v1476 = vmul.f32 %v1475, 1.442695
    %v1477 = vpow.pop %v1476
    %v1478 = vadd.f32 %v1477, 1.0
    %v1479 = vrcp.pop %v1478
    %v1480 = vmul.f32 %v1478, %v1479
    %v1481 = vsub.f32 1.0, %v1480
    %v1482 = vmul.f32 %v1479, %v1481
    %v1483 = vadd.f32 %v1479, %v1482
    %vm1484 = vweird.f32 %v1478
    %vm1485 = vweird.f32 %v1479
    %vm1486 = vmor %vm1484, %vm1485
    %v1487 = vsel %vm1486, %v1479, %v1483
    %v1488 = vand.u32 2147483647, %v1478
    %vm1489 = vcmp.eq.f32.partialorder %v1488, 8.507059e+37
    %v1490 = vand.u32 %v1478, 2147483648
    %v1491 = vor.u32 1.1754944e-38, %v1490
    %v1492 = vsel %vm1489, %v1491, %v1487
    %v1493 = vmul.f32 1.0, %v1492
    %v1494 = vtanh.pop %v1474
    %v1495 = vmul.f32 %v1493, %v1359
    %1497 = vrot.lane.b32.xlu0 %v1494, 64
    %v1498 = vpop.permute.xlu0 %1497
    %v1500 = vmul.f32 %v1493, %v1498
    %1502 = vrot.lane.b32.xlu0 %v1500, 32
    %v1503 = vpop.permute.xlu0 %1502
    %v1505 = vadd.f32 %v1495, %v1503
    %v1506 = vtanh.pop %v1505
    %1508 = vrot.lane.b32.xlu0 %v1506, 64
    %v1509 = vpop.permute.xlu0 %1508
    %v1511 = vmul.f32 %v1493, %v1509
    %1512 = vmatpush.msra.mxu0 0.0
    %1513 = vmatpush.msra.mxu0 0.0
    %1514 = vmatpush.msra.mxu0 0.0
    %1515 = vmatpush.msra.mxu0 0.0
    %1516 = vmatpush.msra.mxu0 0.0
    %1517 = vmatpush.msra.mxu0 0.0
    %1518 = vmatpush.msra.mxu0 0.0
    %1519 = vmatpush.msra.mxu0 0.0
    %1520 = vmatpush.msra.mxu0 0.0
    %1521 = vmatpush.msra.mxu0 0.0
    %1522 = vmatpush.msra.mxu0 0.0
    %1523 = vmatpush.msra.mxu0 0.0
    %1524 = vmatpush.msra.mxu0 %v922
    %1525 = vmatpush.msra.mxu0 %v921
    %1526 = vmatpush.msra.mxu0 %v920
    %1527 = vmatpush.msra.mxu0 %v919
    %1528 = vmatmul.f32.gmra.mxu0 %v1452
    %v1529 = vpop.f32.mrf.mxu0
    %v1530 = vadd.f32 %v926, %v1529
    %1531 = vdwg.mxu0
    %1533 = vrot.lane.b32.xlu0 %v1448, 32
    %v1534 = vpop.permute.xlu0 %1533
    %v1535 = vsel %vm114, %v1534, 0
    %1537 = vmatpush.msra.mxu0 0.0
    %1538 = vmatpush.msra.mxu0 0.0
    %1539 = vmatpush.msra.mxu0 0.0
    %1540 = vmatpush.msra.mxu0 0.0
    %1541 = vmatpush.msra.mxu0 0.0
    %1542 = vmatpush.msra.mxu0 0.0
    %1543 = vmatpush.msra.mxu0 0.0
    %1544 = vmatpush.msra.mxu0 0.0
    %1545 = vmatpush.msra.mxu0 0.0
    %1546 = vmatpush.msra.mxu0 0.0
    %1547 = vmatpush.msra.mxu0 0.0
    %1548 = vmatpush.msra.mxu0 0.0
    %1549 = vmatpush.msra.mxu0 %v952
    %1550 = vmatpush.msra.mxu0 %v951
    %1551 = vmatpush.msra.mxu0 %v950
    %1552 = vmatpush.msra.mxu0 %v949
    %1553 = vmatmul.f32.gmra.mxu0 %v1535
    %v1554 = vpop.f32.mrf.mxu0
    %v1555 = vadd.f32 0.0, %v1554
    %1556 = vdwg.mxu0
    %v1557 = vadd.f32 %v1530, %v1555
    %v1558 = vxor.u32 %v1557, 2147483648
    %v1559 = vmul.f32 %v1558, 1.442695
    %v1560 = vpow.pop %v1559
    %v1561 = vadd.f32 %v1560, 1.0
    %v1562 = vrcp.pop %v1561
    %v1563 = vmul.f32 %v1561, %v1562
    %v1564 = vsub.f32 1.0, %v1563
    %v1565 = vmul.f32 %v1562, %v1564
    %v1566 = vadd.f32 %v1562, %v1565
    %vm1567 = vweird.f32 %v1561
    %vm1568 = vweird.f32 %v1562
    %vm1569 = vmor %vm1567, %vm1568
    %v1570 = vsel %vm1569, %v1562, %v1566
    %v1571 = vand.u32 2147483647, %v1561
    %vm1572 = vcmp.eq.f32.partialorder %v1571, 8.507059e+37
    %v1573 = vand.u32 %v1561, 2147483648
    %v1574 = vor.u32 1.1754944e-38, %v1573
    %v1575 = vsel %vm1572, %v1574, %v1570
    %v1576 = vmul.f32 1.0, %v1575
    %v1577 = vtanh.pop %v1557
    %v1578 = vmul.f32 %v1576, %v1442
    %1580 = vrot.lane.b32.xlu0 %v1577, 64
    %v1581 = vpop.permute.xlu0 %1580
    %v1583 = vmul.f32 %v1576, %v1581
    %1585 = vrot.lane.b32.xlu0 %v1583, 32
    %v1586 = vpop.permute.xlu0 %1585
    %v1588 = vadd.f32 %v1578, %v1586
    %v1589 = vtanh.pop %v1588
    %1591 = vrot.lane.b32.xlu0 %v1589, 64
    %v1592 = vpop.permute.xlu0 %1591
    %v1594 = vmul.f32 %v1576, %v1592
    %1596 = vrot.lane.b32.xlu0 %v1511, 32
    %v1597 = vpop.permute.xlu0 %1596
    %v1598 = vsel %vm114, %v1597, 0
    %1600 = vmatpush.msra.mxu0 0.0
    %1601 = vmatpush.msra.mxu0 0.0
    %1602 = vmatpush.msra.mxu0 0.0
    %1603 = vmatpush.msra.mxu0 0.0
    %1604 = vmatpush.msra.mxu0 0.0
    %1605 = vmatpush.msra.mxu0 0.0
    %1606 = vmatpush.msra.mxu0 0.0
    %1607 = vmatpush.msra.mxu0 0.0
    %1608 = vmatpush.msra.mxu0 0.0
    %1609 = vmatpush.msra.mxu0 0.0
    %1610 = vmatpush.msra.mxu0 0.0
    %1611 = vmatpush.msra.mxu0 0.0
    %1612 = vmatpush.msra.mxu0 %v793
    %1613 = vmatpush.msra.mxu0 %v792
    %1614 = vmatpush.msra.mxu0 %v791
    %1615 = vmatpush.msra.mxu0 %v790
    %1616 = vmatmul.f32.gmra.mxu0 %v1598
    %v1617 = vpop.f32.mrf.mxu0
    %v1618 = vadd.f32 0.0, %v1617
    %1619 = vdwg.mxu0
    %v1620 = vadd.f32 %v748, %v1618
    %v1621 = vxor.u32 %v1620, 2147483648
    %v1622 = vmul.f32 %v1621, 1.442695
    %v1623 = vpow.pop %v1622
    %v1624 = vadd.f32 %v1623, 1.0
    %v1625 = vrcp.pop %v1624
    %v1626 = vmul.f32 %v1624, %v1625
    %v1627 = vsub.f32 1.0, %v1626
    %v1628 = vmul.f32 %v1625, %v1627
    %v1629 = vadd.f32 %v1625, %v1628
    %vm1630 = vweird.f32 %v1624
    %vm1631 = vweird.f32 %v1625
    %vm1632 = vmor %vm1630, %vm1631
    %v1633 = vsel %vm1632, %v1625, %v1629
    %v1634 = vand.u32 2147483647, %v1624
    %vm1635 = vcmp.eq.f32.partialorder %v1634, 8.507059e+37
    %v1636 = vand.u32 %v1624, 2147483648
    %v1637 = vor.u32 1.1754944e-38, %v1636
    %v1638 = vsel %vm1635, %v1637, %v1633
    %v1639 = vmul.f32 1.0, %v1638
    %v1640 = vtanh.pop %v1620
    %v1641 = vmul.f32 %v1639, %v1505
    %1643 = vrot.lane.b32.xlu0 %v1640, 64
    %v1644 = vpop.permute.xlu0 %1643
    %v1646 = vmul.f32 %v1639, %v1644
    %1648 = vrot.lane.b32.xlu0 %v1646, 32
    %v1649 = vpop.permute.xlu0 %1648
    %v1651 = vadd.f32 %v1641, %v1649
    %v1652 = vtanh.pop %v1651
    %1654 = vrot.lane.b32.xlu0 %v1652, 64
    %v1655 = vpop.permute.xlu0 %1654
    %v1657 = vmul.f32 %v1639, %v1655
    %1658 = vmatpush.msra.mxu0 0.0
    %1659 = vmatpush.msra.mxu0 0.0
    %1660 = vmatpush.msra.mxu0 0.0
    %1661 = vmatpush.msra.mxu0 0.0
    %1662 = vmatpush.msra.mxu0 0.0
    %1663 = vmatpush.msra.mxu0 0.0
    %1664 = vmatpush.msra.mxu0 0.0
    %1665 = vmatpush.msra.mxu0 0.0
    %1666 = vmatpush.msra.mxu0 0.0
    %1667 = vmatpush.msra.mxu0 0.0
    %1668 = vmatpush.msra.mxu0 0.0
    %1669 = vmatpush.msra.mxu0 0.0
    %1670 = vmatpush.msra.mxu0 %v922
    %1671 = vmatpush.msra.mxu0 %v921
    %1672 = vmatpush.msra.mxu0 %v920
    %1673 = vmatpush.msra.mxu0 %v919
    %1674 = vmatmul.f32.gmra.mxu0 %v1598
    %v1675 = vpop.f32.mrf.mxu0
    %v1676 = vadd.f32 %v926, %v1675
    %1677 = vdwg.mxu0
    %1679 = vrot.lane.b32.xlu0 %v1594, 32
    %v1680 = vpop.permute.xlu0 %1679
    %v1681 = vsel %vm114, %v1680, 0
    %1683 = vmatpush.msra.mxu0 0.0
    %1684 = vmatpush.msra.mxu0 0.0
    %1685 = vmatpush.msra.mxu0 0.0
    %1686 = vmatpush.msra.mxu0 0.0
    %1687 = vmatpush.msra.mxu0 0.0
    %1688 = vmatpush.msra.mxu0 0.0
    %1689 = vmatpush.msra.mxu0 0.0
    %1690 = vmatpush.msra.mxu0 0.0
    %1691 = vmatpush.msra.mxu0 0.0
    %1692 = vmatpush.msra.mxu0 0.0
    %1693 = vmatpush.msra.mxu0 0.0
    %1694 = vmatpush.msra.mxu0 0.0
    %1695 = vmatpush.msra.mxu0 %v952
    %1696 = vmatpush.msra.mxu0 %v951
    %1697 = vmatpush.msra.mxu0 %v950
    %1698 = vmatpush.msra.mxu0 %v949
    %1699 = vmatmul.f32.gmra.mxu0 %v1681
    %v1700 = vpop.f32.mrf.mxu0
    %v1701 = vadd.f32 0.0, %v1700
    %1702 = vdwg.mxu0
    %v1703 = vadd.f32 %v1676, %v1701
    %v1704 = vxor.u32 %v1703, 2147483648
    %v1705 = vmul.f32 %v1704, 1.442695
    %v1706 = vpow.pop %v1705
    %v1707 = vadd.f32 %v1706, 1.0
    %v1708 = vrcp.pop %v1707
    %v1709 = vmul.f32 %v1707, %v1708
    %v1710 = vsub.f32 1.0, %v1709
    %v1711 = vmul.f32 %v1708, %v1710
    %v1712 = vadd.f32 %v1708, %v1711
    %vm1713 = vweird.f32 %v1707
    %vm1714 = vweird.f32 %v1708
    %vm1715 = vmor %vm1713, %vm1714
    %v1716 = vsel %vm1715, %v1708, %v1712
    %v1717 = vand.u32 2147483647, %v1707
    %vm1718 = vcmp.eq.f32.partialorder %v1717, 8.507059e+37
    %v1719 = vand.u32 %v1707, 2147483648
    %v1720 = vor.u32 1.1754944e-38, %v1719
    %v1721 = vsel %vm1718, %v1720, %v1716
    %v1722 = vmul.f32 1.0, %v1721
    %v1723 = vtanh.pop %v1703
    %v1724 = vmul.f32 %v1722, %v1588
    %1726 = vrot.lane.b32.xlu0 %v1723, 64
    %v1727 = vpop.permute.xlu0 %1726
    %v1729 = vmul.f32 %v1722, %v1727
    %1731 = vrot.lane.b32.xlu0 %v1729, 32
    %v1732 = vpop.permute.xlu0 %1731
    %v1734 = vadd.f32 %v1724, %v1732
    %v1735 = vtanh.pop %v1734
    %1737 = vrot.lane.b32.xlu0 %v1735, 64
    %v1738 = vpop.permute.xlu0 %1737
    %v1740 = vmul.f32 %v1722, %v1738
    %1742 = vrot.lane.b32.xlu0 %v1657, 32
    %v1743 = vpop.permute.xlu0 %1742
    %v1744 = vsel %vm114, %v1743, 0
    %1746 = vmatpush.msra.mxu0 0.0
    %1747 = vmatpush.msra.mxu0 0.0
    %1748 = vmatpush.msra.mxu0 0.0
    %1749 = vmatpush.msra.mxu0 0.0
    %1750 = vmatpush.msra.mxu0 0.0
    %1751 = vmatpush.msra.mxu0 0.0
    %1752 = vmatpush.msra.mxu0 0.0
    %1753 = vmatpush.msra.mxu0 0.0
    %1754 = vmatpush.msra.mxu0 0.0
    %1755 = vmatpush.msra.mxu0 0.0
    %1756 = vmatpush.msra.mxu0 0.0
    %1757 = vmatpush.msra.mxu0 0.0
    %1758 = vmatpush.msra.mxu0 %v793
    %1759 = vmatpush.msra.mxu0 %v792
    %1760 = vmatpush.msra.mxu0 %v791
    %1761 = vmatpush.msra.mxu0 %v790
    %1762 = vmatmul.f32.gmra.mxu0 %v1744
    %v1763 = vpop.f32.mrf.mxu0
    %v1764 = vadd.f32 0.0, %v1763
    %1765 = vdwg.mxu0
    %v1766 = vadd.f32 %v788, %v1764
    %v1767 = vxor.u32 %v1766, 2147483648
    %v1768 = vmul.f32 %v1767, 1.442695
    %v1769 = vpow.pop %v1768
    %v1770 = vadd.f32 %v1769, 1.0
    %v1771 = vrcp.pop %v1770
    %v1772 = vmul.f32 %v1770, %v1771
    %v1773 = vsub.f32 1.0, %v1772
    %v1774 = vmul.f32 %v1771, %v1773
    %v1775 = vadd.f32 %v1771, %v1774
    %vm1776 = vweird.f32 %v1770
    %vm1777 = vweird.f32 %v1771
    %vm1778 = vmor %vm1776, %vm1777
    %v1779 = vsel %vm1778, %v1771, %v1775
    %v1780 = vand.u32 2147483647, %v1770
    %vm1781 = vcmp.eq.f32.partialorder %v1780, 8.507059e+37
    %v1782 = vand.u32 %v1770, 2147483648
    %v1783 = vor.u32 1.1754944e-38, %v1782
    %v1784 = vsel %vm1781, %v1783, %v1779
    %v1785 = vmul.f32 1.0, %v1784
    %v1786 = vtanh.pop %v1766
    %v1787 = vmul.f32 %v1785, %v1651
    %1789 = vrot.lane.b32.xlu0 %v1786, 64
    %v1790 = vpop.permute.xlu0 %1789
    %v1792 = vmul.f32 %v1785, %v1790
    %1794 = vrot.lane.b32.xlu0 %v1792, 32
    %v1795 = vpop.permute.xlu0 %1794
    %v1797 = vadd.f32 %v1787, %v1795
    %v1798 = vtanh.pop %v1797
    %1800 = vrot.lane.b32.xlu0 %v1798, 64
    %v1801 = vpop.permute.xlu0 %1800
    %v1803 = vmul.f32 %v1785, %v1801
    %1804 = vmatpush.msra.mxu0 0.0
    %1805 = vmatpush.msra.mxu0 0.0
    %1806 = vmatpush.msra.mxu0 0.0
    %1807 = vmatpush.msra.mxu0 0.0
    %1808 = vmatpush.msra.mxu0 0.0
    %1809 = vmatpush.msra.mxu0 0.0
    %1810 = vmatpush.msra.mxu0 0.0
    %1811 = vmatpush.msra.mxu0 0.0
    %1812 = vmatpush.msra.mxu0 0.0
    %1813 = vmatpush.msra.mxu0 0.0
    %1814 = vmatpush.msra.mxu0 0.0
    %1815 = vmatpush.msra.mxu0 0.0
    %1816 = vmatpush.msra.mxu0 %v922
    %1817 = vmatpush.msra.mxu0 %v921
    %1818 = vmatpush.msra.mxu0 %v920
    %1819 = vmatpush.msra.mxu0 %v919
    %1820 = vmatmul.f32.gmra.mxu0 %v1744
    %v1821 = vpop.f32.mrf.mxu0
    %v1822 = vadd.f32 %v926, %v1821
    %1823 = vdwg.mxu0
    %1825 = vrot.lane.b32.xlu0 %v1740, 32
    %v1826 = vpop.permute.xlu0 %1825
    %v1827 = vsel %vm114, %v1826, 0
    %1829 = vmatpush.msra.mxu0 0.0
    %1830 = vmatpush.msra.mxu0 0.0
    %1831 = vmatpush.msra.mxu0 0.0
    %1832 = vmatpush.msra.mxu0 0.0
    %1833 = vmatpush.msra.mxu0 0.0
    %1834 = vmatpush.msra.mxu0 0.0
    %1835 = vmatpush.msra.mxu0 0.0
    %1836 = vmatpush.msra.mxu0 0.0
    %1837 = vmatpush.msra.mxu0 0.0
    %1838 = vmatpush.msra.mxu0 0.0
    %1839 = vmatpush.msra.mxu0 0.0
    %1840 = vmatpush.msra.mxu0 0.0
    %1841 = vmatpush.msra.mxu0 %v952
    %1842 = vmatpush.msra.mxu0 %v951
    %1843 = vmatpush.msra.mxu0 %v950
    %1844 = vmatpush.msra.mxu0 %v949
    %1845 = vmatmul.f32.gmra.mxu0 %v1827
    %v1846 = vpop.f32.mrf.mxu0
    %v1847 = vadd.f32 0.0, %v1846
    %1848 = vdwg.mxu0
    %v1849 = vadd.f32 %v1822, %v1847
    %v1850 = vxor.u32 %v1849, 2147483648
    %v1851 = vmul.f32 %v1850, 1.442695
    %v1852 = vpow.pop %v1851
    %v1853 = vadd.f32 %v1852, 1.0
    %v1854 = vrcp.pop %v1853
    %v1855 = vmul.f32 %v1853, %v1854
    %v1856 = vsub.f32 1.0, %v1855
    %v1857 = vmul.f32 %v1854, %v1856
    %v1858 = vadd.f32 %v1854, %v1857
    %vm1859 = vweird.f32 %v1853
    %vm1860 = vweird.f32 %v1854
    %vm1861 = vmor %vm1859, %vm1860
    %v1862 = vsel %vm1861, %v1854, %v1858
    %v1863 = vand.u32 2147483647, %v1853
    %vm1864 = vcmp.eq.f32.partialorder %v1863, 8.507059e+37
    %v1865 = vand.u32 %v1853, 2147483648
    %v1866 = vor.u32 1.1754944e-38, %v1865
    %v1867 = vsel %vm1864, %v1866, %v1862
    %v1868 = vmul.f32 1.0, %v1867
    %v1869 = vtanh.pop %v1849
    %v1870 = vmul.f32 %v1868, %v1734
    %1872 = vrot.lane.b32.xlu0 %v1869, 64
    %v1873 = vpop.permute.xlu0 %1872
    %v1875 = vmul.f32 %v1868, %v1873
    %1877 = vrot.lane.b32.xlu0 %v1875, 32
    %v1878 = vpop.permute.xlu0 %1877
    %v1880 = vadd.f32 %v1870, %v1878
    %v1881 = vtanh.pop %v1880
    %1883 = vrot.lane.b32.xlu0 %v1881, 64
    %v1884 = vpop.permute.xlu0 %1883
    %v1886 = vmul.f32 %v1868, %v1884
    %1888 = vrot.lane.b32.xlu0 %v1803, 32
    %v1889 = vpop.permute.xlu0 %1888
    %v1890 = vsel %vm114, %v1889, 0
    %1892 = vmatpush.msra.mxu0 0.0
    %1893 = vmatpush.msra.mxu0 0.0
    %1894 = vmatpush.msra.mxu0 0.0
    %1895 = vmatpush.msra.mxu0 0.0
    %1896 = vmatpush.msra.mxu0 0.0
    %1897 = vmatpush.msra.mxu0 0.0
    %1898 = vmatpush.msra.mxu0 0.0
    %1899 = vmatpush.msra.mxu0 0.0
    %1900 = vmatpush.msra.mxu0 0.0
    %1901 = vmatpush.msra.mxu0 0.0
    %1902 = vmatpush.msra.mxu0 0.0
    %1903 = vmatpush.msra.mxu0 0.0
    %1904 = vmatpush.msra.mxu0 %v922
    %1905 = vmatpush.msra.mxu0 %v921
    %1906 = vmatpush.msra.mxu0 %v920
    %1907 = vmatpush.msra.mxu0 %v919
    %1908 = vmatmul.f32.gmra.mxu0 %v1890
    %v1909 = vpop.f32.mrf.mxu0
    %v1910 = vadd.f32 %v926, %v1909
    %1911 = vdwg.mxu0
    %1913 = vrot.lane.b32.xlu0 %v1886, 32
    %v1914 = vpop.permute.xlu0 %1913
    %v1915 = vsel %vm114, %v1914, 0
    %1917 = vmatpush.msra.mxu0 0.0
    %1918 = vmatpush.msra.mxu0 0.0
    %1919 = vmatpush.msra.mxu0 0.0
    %1920 = vmatpush.msra.mxu0 0.0
    %1921 = vmatpush.msra.mxu0 0.0
    %1922 = vmatpush.msra.mxu0 0.0
    %1923 = vmatpush.msra.mxu0 0.0
    %1924 = vmatpush.msra.mxu0 0.0
    %1925 = vmatpush.msra.mxu0 0.0
    %1926 = vmatpush.msra.mxu0 0.0
    %1927 = vmatpush.msra.mxu0 0.0
    %1928 = vmatpush.msra.mxu0 0.0
    %1929 = vmatpush.msra.mxu0 %v952
    %1930 = vmatpush.msra.mxu0 %v951
    %1931 = vmatpush.msra.mxu0 %v950
    %1932 = vmatpush.msra.mxu0 %v949
    %1933 = vmatmul.f32.gmra.mxu0 %v1915
    %v1934 = vpop.f32.mrf.mxu0
    %v1935 = vadd.f32 0.0, %v1934
    %1936 = vdwg.mxu0
    %v1937 = vadd.f32 %v1910, %v1935
    %v1938 = vxor.u32 %v1937, 2147483648
    %v1939 = vmul.f32 %v1938, 1.442695
    %v1940 = vpow.pop %v1939
    %v1941 = vadd.f32 %v1940, 1.0
    %v1942 = vrcp.pop %v1941
    %v1943 = vmul.f32 %v1941, %v1942
    %v1944 = vsub.f32 1.0, %v1943
    %v1945 = vmul.f32 %v1942, %v1944
    %v1946 = vadd.f32 %v1942, %v1945
    %vm1947 = vweird.f32 %v1941
    %vm1948 = vweird.f32 %v1942
    %vm1949 = vmor %vm1947, %vm1948
    %v1950 = vsel %vm1949, %v1942, %v1946
    %v1951 = vand.u32 2147483647, %v1941
    %vm1952 = vcmp.eq.f32.partialorder %v1951, 8.507059e+37
    %v1953 = vand.u32 %v1941, 2147483648
    %v1954 = vor.u32 1.1754944e-38, %v1953
    %v1955 = vsel %vm1952, %v1954, %v1950
    %v1956 = vmul.f32 1.0, %v1955
    %v1957 = vtanh.pop %v1937
    %v1958 = vmul.f32 %v1956, %v1880
    %1960 = vrot.lane.b32.xlu0 %v1957, 64
    %v1961 = vpop.permute.xlu0 %1960
    %v1963 = vmul.f32 %v1956, %v1961
    %1965 = vrot.lane.b32.xlu0 %v1963, 32
    %v1966 = vpop.permute.xlu0 %1965
    %v1968 = vadd.f32 %v1958, %v1966
    %v1969 = vtanh.pop %v1968
    %1971 = vrot.lane.b32.xlu0 %v1969, 64
    %v1972 = vpop.permute.xlu0 %1971
    %v1974 = vmul.f32 %v1956, %v1972
    %v1975 = vld [vmem:[%s8] sm:$0xff]
    %v1976 = vld [vmem:[%s8 + $0x8] sm:$0xff]
    %v1977 = vld [vmem:[%s8 + $0x10] sm:$0xff]
    %v1978 = vld [vmem:[%s8 + $0x18] sm:$0xff]
    %v1979 = vld [vmem:[%s9] sm:$0x1]
    %v1981 = vperm.slane %v1979, 0
    %1984 = vrot.lane.b32.xlu0 %v1974, 32
    %v1985 = vpop.permute.xlu0 %1984
    %v1986 = vsel %vm114, %v1985, 0
    %1988 = vmatpush.msra.mxu0 0.0
    %1989 = vmatpush.msra.mxu0 0.0
    %1990 = vmatpush.msra.mxu0 0.0
    %1991 = vmatpush.msra.mxu0 0.0
    %1992 = vmatpush.msra.mxu0 0.0
    %1993 = vmatpush.msra.mxu0 0.0
    %1994 = vmatpush.msra.mxu0 0.0
    %1995 = vmatpush.msra.mxu0 0.0
    %1996 = vmatpush.msra.mxu0 0.0
    %1997 = vmatpush.msra.mxu0 0.0
    %1998 = vmatpush.msra.mxu0 0.0
    %1999 = vmatpush.msra.mxu0 0.0
    %2000 = vmatpush.msra.mxu0 %v1978
    %2001 = vmatpush.msra.mxu0 %v1977
    %2002 = vmatpush.msra.mxu0 %v1976
    %2003 = vmatpush.msra.mxu0 %v1975
    %2004 = vmatmul.f32.gmra.mxu0 %v1986
    %v2005 = vpop.f32.mrf.mxu0
    %v2006 = vadd.f32 %v1981, %v2005
    %2007 = vdwg.mxu0
    %vm2008 = vcmask 25600
    %2009 = vst.msk [vmem:[#allocation10] sm:$0x3] %vm2008, %v2006
    // Predicated region
    $region58: #{fwd.1} parent=1 // pred_check
      _
    $region59: #{fwd.1} parent=1 // pred_check_branch
      %2011 = sbr.rel (0) target = $region61
    $region60: #{fwd.1} parent=1 // pred_region
      %2013 = vsyncadd [#allocation4], 0
      %s2015 = sshll.u32 [#allocation10], 4
      %s2016 = int_to_ptr.vmem [resolvable:$true] %s2015
      %s2017 = sshll.u32 %s10, 4
      %s2018 = int_to_ptr.hbm [resolvable:$true] %s2017
      %2020 = dma.vmem_to_hbm [thread:$0]  %s2016, 32, %s2018, [#allocation4]
    $region61: #{fwd.1} parent=1 // pred_fallthru
      _
    // Predicated region
    $region62: #{fwd.1} parent=1 // pred_check
      _
    $region63: #{fwd.1} parent=1 // pred_check_branch
      %2022 = sbr.rel (0) target = $region65
    $region64: #{fwd.1} parent=1 // pred_region
      %2024 = dma.done [#allocation4], 32
    $region65: #{fwd.1} parent=1 // pred_fallthru
      _
    %2025 = vsyncpa [#allocation3], 1
    %2026 = vsyncpa [#allocation6], 1
    %2027 = vsyncpa [#allocation9], 1
    %2028 = vsyncpa [#allocation4], 1

</llo_original>
